<compile_context>
chip_gen: v7x
topology: tpu7x:2x2x1
jax: 0.10.0
libtpu: 0.0.40
codegen_flags: <defaults>
</compile_context>

<pallas_src>
import functools

import jax
import jax.numpy as jnp
from jax.experimental import pallas as pl
from jax.experimental.pallas import tpu as pltpu


# ----------------------------------------------------------------------------
# ELU helpers (alpha = 1)
# ----------------------------------------------------------------------------
def _elu_ref(y):
    # Plain-JAX ELU: expm1 for accuracy near 0; clamp keeps exp() off the
    # (discarded) positive branch so it cannot overflow.
    return jnp.where(y > 0, y, jnp.expm1(jnp.minimum(y, 0.0)))


def _elu_kernel(y):
    # In-kernel ELU. expm1-accurate via the identity
    #   expm1(x) = tanh(x/2) * (exp(x) + 1)
    # using only exp/tanh (both have guaranteed Mosaic lowerings and run on
    # the EUP slot, which is free while the MXU is busy). The clamp keeps the
    # discarded positive branch from overflowing to inf.
    yn = jnp.minimum(y, 0.0)
    em1 = jnp.tanh(0.5 * yn) * (jnp.exp(yn) + 1.0)
    return jnp.where(y > 0, y, em1)


# ----------------------------------------------------------------------------
# Fused decoder MLP kernel: one row-tile of  g = MLP([X, Q])
# ----------------------------------------------------------------------------
def _decoder_mlp_kernel(x_ref, q_ref, w1x_ref, w1q_ref, b1_ref, *rest,
                        n_hidden, matmul_dtype):
    # rest = [wh_0, bh_0, ..., wh_{n_hidden-1}, bh_{n_hidden-1},
    #         wlast_t, blast, o_ref]
    o_ref = rest[-1]
    wlast_ref = rest[-3]
    blast_ref = rest[-2]
    hid = rest[:2 * n_hidden]

    # Layer 1: ELU(X @ W1x + Q @ W1q + b1). The Q term implements the
    # broadcast+concat of the latent code in-kernel (no Xhat in HBM).
    h = jnp.dot(x_ref[...], w1x_ref[...], preferred_element_type=jnp.float32)
    h = h + jnp.dot(q_ref[...], w1q_ref[...], preferred_element_type=jnp.float32)
    h = h + b1_ref[...]
    h = _elu_kernel(h)

    # Hidden layers (unrolled at trace time); activations stay in VMEM/vregs,
    # accumulation in f32 (matmul inputs may be bf16 on v6e/v7x).
    for i in range(n_hidden):
        w_ref = hid[2 * i]
        b_ref = hid[2 * i + 1]
        h = jnp.dot(h.astype(matmul_dtype), w_ref[...],
                    preferred_element_type=jnp.float32) + b_ref[...]
        h = _elu_kernel(h)

    # Final projection computed directly as [d, TILE_P] (contract H on both
    # operands) so the output store is lane-dense instead of a masked
    # d(=4)/128-lane store.
    y = jax.lax.dot_general(
        wlast_ref[...], h.astype(matmul_dtype),
        dimension_numbers=(((1,), (1,)), ((), ())),
        preferred_element_type=jnp.float32)
    o_ref[...] = (y + blast_ref[...]).astype(o_ref.dtype)


def _pick_tile_p(p, max_tile_p):
    """Largest row tile <= max_tile_p that divides p (prefer 128-multiples)."""
    if p <= max_tile_p:
        return p
    for t in range(max_tile_p, 0, -1):
        if p % t == 0 and (t % 128 == 0 or t == p):
            return t
    for t in range(max_tile_p, 0, -1):
        if p % t == 0 and t % 8 == 0:
            return t
    return max_tile_p  # last resort; Pallas pads the ragged final tile


def decoder_forward_pallas(dec_packed, X, Q, *, max_tile_p=512):
    """X: [B, p, din], Q: [B, r]  ->  [B*p, dout]  (== torch decoder(Xhat))."""
    B, p, din = X.shape
    r = Q.shape[-1]
    w1x = dec_packed["w1x"]
    w1q = dec_packed["w1q"]
    b1 = dec_packed["b1"]
    hidden = dec_packed["hidden"]
    wlast_t = dec_packed["wlast_t"]
    blast = dec_packed["blast"]
    H = w1x.shape[1]
    d_out = wlast_t.shape[0]
    n_hidden = len(hidden) // 2
    matmul_dtype = w1x.dtype

    tile_p = _pick_tile_p(p, max_tile_p)
    grid = (B, pl.cdiv(p, tile_p))

    x = X.astype(matmul_dtype)
    q = Q.reshape(B, 1, r).astype(matmul_dtype)

    weight_args = (w1x, w1q, b1) + tuple(hidden) + (wlast_t, blast)
    # Constant index_map -> weights are fetched into VMEM once and stay resident.
    weight_specs = [pl.BlockSpec(w.shape, lambda b, i: (0, 0)) for w in weight_args]

    in_specs = [
        pl.BlockSpec((None, tile_p, din), lambda b, i: (b, i, 0)),  # X row tile
        pl.BlockSpec((None, 1, r), lambda b, i: (b, 0, 0)),         # latent code of batch b
    ] + weight_specs
    out_spec = pl.BlockSpec((None, d_out, tile_p), lambda b, i: (b, 0, i))

    # VMEM budget: resident weights + double-buffered X/out tiles + ~2 live
    # [tile_p, H] f32 activations. Clamp to stay under v7x's 64 MiB physical
    # VMEM (v5e/v6e have 128 MiB, so this is portable across generations).
    itemsize = jnp.dtype(matmul_dtype).itemsize
    weight_bytes = sum(int(w.size) * jnp.dtype(w.dtype).itemsize for w in weight_args)
    tile_bytes = 2 * (tile_p * din * itemsize + d_out * tile_p * 4)
    act_bytes = 2 * tile_p * H * 4
    vmem_limit = int(min(96 * 1024 * 1024,
                         max(32 * 1024 * 1024,
                             int(1.25 * (weight_bytes + tile_bytes + act_bytes)))))

    flops = 2 * B * p * ((din + r) * H + n_hidden * H * H + H * d_out)
    cost = pl.CostEstimate(
        flops=flops,
        transcendentals=B * p * H * (n_hidden + 1),
        bytes_accessed=int(x.size * itemsize + q.size * itemsize
                           + weight_bytes + B * d_out * p * 4),
    )

    out = pl.pallas_call(
        functools.partial(_decoder_mlp_kernel,
                          n_hidden=n_hidden, matmul_dtype=matmul_dtype),
        out_shape=jax.ShapeDtypeStruct((B, d_out, p), jnp.float32),
        grid=grid,
        in_specs=in_specs,
        out_specs=out_spec,
        compiler_params=pltpu.CompilerParams(
            # Both grid axes are independent row tiles -> shard across the two
            # TensorCores on v7x; no effect on single-TC v5e/v6e.
            dimension_semantics=("parallel", "parallel"),
            vmem_limit_bytes=vmem_limit,
        ),
        cost_estimate=cost,
    )(x, q, *weight_args)

    # [B, d, p] (lane-dense kernel stores) -> [B*p, d] to match torch flatten(0, 1).
    return jnp.transpose(out, (0, 2, 1)).reshape(B * p, d_out)


# ----------------------------------------------------------------------------
# Parameter construction (deterministic, mirrors the PyTorch module shapes)
# ----------------------------------------------------------------------------
def init_params(key, *, p, d, din, r, beta, nlayers, k, s):
    keys = iter(jax.random.split(key, 64))

    def _lin(kk, fan_in, fan_out):
        lim = 1.0 / (fan_in ** 0.5)
        w = jax.random.uniform(kk, (fan_in, fan_out), jnp.float32, -lim, lim)
        b = jax.random.uniform(next(keys), (fan_out,), jnp.float32, -lim, lim)
        return w, b

    # --- Encoder: Conv1d(d, d, k, s) stack while L > 32 (matches torch loop) ---
    conv = []
    L = p
    while L > 32:
        L = int((L - (k - 1) - 1) / s + 1)
        lim = 1.0 / ((d * k) ** 0.5)
        w = jax.random.uniform(next(keys), (d, d, k), jnp.float32, -lim, lim)  # [out, in, k]
        b = jax.random.uniform(next(keys), (d,), jnp.float32, -lim, lim)
        conv.append((w, b))
    lin1 = _lin(next(keys), L * d, 32)
    lin2 = _lin(next(keys), 32, r)
    enc = {"conv": conv, "lin1": lin1, "lin2": lin2}

    # --- Decoder MLP: (din+r)->beta*d, (nlayers-2)x beta*d->beta*d, beta*d->d ---
    H = beta * d
    dec = [_lin(next(keys), din + r, H)]
    for _ in range(nlayers - 2):
        dec.append(_lin(next(keys), H, H))
    dec.append(_lin(next(keys), H, d))
    return {"enc": enc, "dec": dec}


def pack_decoder_params(dec, *, din, compute_dtype=jnp.float32):
    """One-time repack of decoder weights into kernel-ready layout.

    compute_dtype=jnp.bfloat16 is recommended on v6e/v7x (halves weight DMA /
    VMEM; MXU-native); biases and accumulation stay f32. Default f32 keeps
    exact parity with the reference for the correctness check below.
    """
    w1, b1 = dec[0]
    H = w1.shape[1]
    packed = {
        "w1x": w1[:din].astype(compute_dtype),            # [din, H]
        "w1q": w1[din:].astype(compute_dtype),            # [r,   H]
        "b1": b1.reshape(1, H).astype(jnp.float32),       # [1,   H]
    }
    hidden = []
    for w, b in dec[1:-1]:
        hidden.append(w.astype(compute_dtype))            # [H, H]
        hidden.append(b.reshape(1, -1).astype(jnp.float32))
    packed["hidden"] = tuple(hidden)
    wl, bl = dec[-1]
    packed["wlast_t"] = wl.T.astype(compute_dtype)        # [d, H] (transposed)
    packed["blast"] = bl.reshape(-1, 1).astype(jnp.float32)  # [d, 1]
    return packed


# ----------------------------------------------------------------------------
# Encoder: tiny, launch-overhead-bound -> plain JAX/XLA.
# TODO(synk): the encoder conv/linear stack is left to XLA on purpose; its
# total work is O(100) rows and a Pallas launch would be pure overhead.
# ----------------------------------------------------------------------------
def encoder_forward(enc, f, *, k, s):
    x = f  # [B, L, d] channels-last view of torch's NCW [B, d, L]
    B = x.shape[0]
    for w, b in enc["conv"]:
        L = x.shape[1]
        Lout = (L - k) // s + 1
        idx = jnp.arange(Lout)[:, None] * s + jnp.arange(k)[None, :]   # [Lout, k]
        patches = x[:, idx, :]                                         # [B, Lout, k, d_in]
        y = jnp.einsum("blki,oik->blo", patches, w) + b                # Conv1d (NCW) as matmul
        x = _elu_ref(y)
    # torch: X.flatten(1, 2) on the NCW tensor [B, d, L]  ->  [B, d*L]
    flat = jnp.transpose(x, (0, 2, 1)).reshape(B, -1)
    (w1, b1), (w2, b2) = enc["lin1"], enc["lin2"]
    h = _elu_ref(flat @ w1 + b1)
    return h @ w2 + b2  # [B, r]


# ----------------------------------------------------------------------------
# Full CROM forward (Pallas decoder) and a pure-JAX reference.
# ----------------------------------------------------------------------------
def crom_forward(params, f, X, *, k, s):
    Q = encoder_forward(params["enc"], f, k=k, s=s)            # [B, r]
    return decoder_forward_pallas(params["dec_packed"], X, Q)  # [B*p, d]


def crom_forward_ref(params, f, X, *, k, s):
    Q = encoder_forward(params["enc"], f, k=k, s=s)
    B, p, _ = X.shape
    Qexp = jnp.broadcast_to(Q[:, None, :], (B, p, Q.shape[-1]))
    h = jnp.concatenate([X, Qexp], axis=-1).reshape(B * p, -1)
    dec = params["dec"]
    for i, (w, b) in enumerate(dec):
        h = h @ w + b
        if i < len(dec) - 1:
            h = _elu_ref(h)
    return h


# ----------------------------------------------------------------------------
if __name__ == "__main__":
    # Small but structurally faithful shapes:
    #   p=64 -> exactly one Conv1d(k=6, s=4) layer in the encoder (L: 64 -> 15)
    #   beta=32, d=4 -> hidden width H=128 (one full lane of the MXU/VPU)
    B, p, d, din, r = 2, 64, 4, 3, 8
    beta, nlayers, k, s = 32, 5, 6, 4

    key = jax.random.PRNGKey(0)
    kp, kf, kx = jax.random.split(key, 3)
    params = init_params(kp, p=p, d=d, din=din, r=r,
                         beta=beta, nlayers=nlayers, k=k, s=s)
    # One-time kernel-ready repack (pre-split / pre-transpose / pre-reshape).
    params["dec_packed"] = pack_decoder_params(params["dec"], din=din)

    f_in = jax.random.normal(kf, (B, p, d), jnp.float32)    # |#batch|x|#samples|x|#out dims|
    X_in = jax.random.normal(kx, (B, p, din), jnp.float32)  # query points

    fwd = jax.jit(functools.partial(crom_forward, k=k, s=s))
    g = jax.block_until_ready(fwd(params, f_in, X_in))
    assert g.shape == (B * p, d), g.shape

    # Pure-JAX reference (same math, no Pallas) for a correctness sanity check.
    g_ref = jax.block_until_ready(crom_forward_ref(params, f_in, X_in, k=k, s=s))
    assert jnp.allclose(g, g_ref, atol=1e-4, rtol=1e-4), \
        float(jnp.max(jnp.abs(g - g_ref)))

    print("KERNEL_OK")
</pallas_src>

<mosaic_0001>
module attributes {stable_mosaic.version = 11 : i64} {
  func.func @_decoder_mlp_kernel(%arg0: i32, %arg1: i32, %arg2: memref<1x64x3xf32, #tpu.memory_space<vmem>>, %arg3: memref<1x1x8xf32, #tpu.memory_space<vmem>>, %arg4: memref<3x128xf32, #tpu.memory_space<vmem>>, %arg5: memref<8x128xf32, #tpu.memory_space<vmem>>, %arg6: memref<1x128xf32, #tpu.memory_space<vmem>>, %arg7: memref<128x128xf32, #tpu.memory_space<vmem>>, %arg8: memref<1x128xf32, #tpu.memory_space<vmem>>, %arg9: memref<128x128xf32, #tpu.memory_space<vmem>>, %arg10: memref<1x128xf32, #tpu.memory_space<vmem>>, %arg11: memref<128x128xf32, #tpu.memory_space<vmem>>, %arg12: memref<1x128xf32, #tpu.memory_space<vmem>>, %arg13: memref<4x128xf32, #tpu.memory_space<vmem>>, %arg14: memref<4x1xf32, #tpu.memory_space<vmem>>, %arg15: memref<1x4x64xf32, #tpu.memory_space<vmem>>) attributes {dimension_semantics = [#tpu.dimension_semantics<parallel>, #tpu.dimension_semantics<parallel>], iteration_bounds = array<i64: 2, 1>, scalar_prefetch = 0 : i64, scratch_operands = 0 : i64, tpu.core_type = #tpu.core_type<tc>, window_params = [{transform_indices = @transform_0, window_bounds = array<i64: 1, 64, 3>}, {transform_indices = @transform_1, window_bounds = array<i64: 1, 1, 8>}, {pipeline_mode = #tpu.pipeline_mode<synchronous>, transform_indices = @transform_2, window_bounds = array<i64: 3, 128>}, {pipeline_mode = #tpu.pipeline_mode<synchronous>, transform_indices = @transform_3, window_bounds = array<i64: 8, 128>}, {pipeline_mode = #tpu.pipeline_mode<synchronous>, transform_indices = @transform_4, window_bounds = array<i64: 1, 128>}, {pipeline_mode = #tpu.pipeline_mode<synchronous>, transform_indices = @transform_5, window_bounds = array<i64: 128, 128>}, {pipeline_mode = #tpu.pipeline_mode<synchronous>, transform_indices = @transform_6, window_bounds = array<i64: 1, 128>}, {pipeline_mode = #tpu.pipeline_mode<synchronous>, transform_indices = @transform_7, window_bounds = array<i64: 128, 128>}, {pipeline_mode = #tpu.pipeline_mode<synchronous>, transform_indices = @transform_8, window_bounds = array<i64: 1, 128>}, {pipeline_mode = #tpu.pipeline_mode<synchronous>, transform_indices = @transform_9, window_bounds = array<i64: 128, 128>}, {pipeline_mode = #tpu.pipeline_mode<synchronous>, transform_indices = @transform_10, window_bounds = array<i64: 1, 128>}, {pipeline_mode = #tpu.pipeline_mode<synchronous>, transform_indices = @transform_11, window_bounds = array<i64: 4, 128>}, {pipeline_mode = #tpu.pipeline_mode<synchronous>, transform_indices = @transform_12, window_bounds = array<i64: 4, 1>}, {transform_indices = @transform_13, window_bounds = array<i64: 1, 4, 64>}]} {
    %c0 = arith.constant 0 : index
    %c0_0 = arith.constant 0 : index
    %c0_1 = arith.constant 0 : index
    %0 = vector.load %arg2[%c0, %c0_0, %c0_1] : memref<1x64x3xf32, #tpu.memory_space<vmem>>, vector<1x64x3xf32>
    %1 = vector.shape_cast %0 : vector<1x64x3xf32> to vector<64x3xf32>
    %c0_2 = arith.constant 0 : index
    %c0_3 = arith.constant 0 : index
    %2 = vector.load %arg4[%c0_2, %c0_3] : memref<3x128xf32, #tpu.memory_space<vmem>>, vector<3x128xf32>
    %cst = arith.constant dense<0.000000e+00> : vector<64x128xf32>
    %3 = tpu.matmul %1, %2, %cst {dimension_numbers = #tpu.dot_dimension_numbers<[1], [0], [0], [1], [0, 0, 1, 1], [], []>} : vector<64x3xf32>, vector<3x128xf32>, vector<64x128xf32> -> vector<64x128xf32>
    %c0_4 = arith.constant 0 : index
    %c0_5 = arith.constant 0 : index
    %c0_6 = arith.constant 0 : index
    %4 = vector.load %arg3[%c0_4, %c0_5, %c0_6] : memref<1x1x8xf32, #tpu.memory_space<vmem>>, vector<1x1x8xf32>
    %5 = vector.shape_cast %4 : vector<1x1x8xf32> to vector<1x8xf32>
    %c0_7 = arith.constant 0 : index
    %c0_8 = arith.constant 0 : index
    %6 = vector.load %arg5[%c0_7, %c0_8] : memref<8x128xf32, #tpu.memory_space<vmem>>, vector<8x128xf32>
    %cst_9 = arith.constant dense<0.000000e+00> : vector<1x128xf32>
    %7 = tpu.matmul %5, %6, %cst_9 {dimension_numbers = #tpu.dot_dimension_numbers<[1], [0], [0], [1], [0, 0, 1, 1], [], []>} : vector<1x8xf32>, vector<8x128xf32>, vector<1x128xf32> -> vector<1x128xf32>
    %8 = vector.broadcast %7 : vector<1x128xf32> to vector<64x128xf32>
    %9 = arith.addf %3, %8 : vector<64x128xf32>
    %c0_10 = arith.constant 0 : index
    %c0_11 = arith.constant 0 : index
    %10 = vector.load %arg6[%c0_10, %c0_11] : memref<1x128xf32, #tpu.memory_space<vmem>>, vector<1x128xf32>
    %11 = vector.broadcast %10 : vector<1x128xf32> to vector<64x128xf32>
    %12 = arith.addf %9, %11 : vector<64x128xf32>
    %cst_12 = arith.constant 0.000000e+00 : f32
    %13 = vector.broadcast %cst_12 : f32 to vector<64x128xf32>
    %14 = arith.minimumf %12, %13 : vector<64x128xf32>
    %cst_13 = arith.constant 5.000000e-01 : f32
    %15 = vector.broadcast %cst_13 : f32 to vector<64x128xf32>
    %16 = arith.mulf %15, %14 : vector<64x128xf32>
    %17 = math.tanh %16 : vector<64x128xf32>
    %18 = math.exp %14 : vector<64x128xf32>
    %cst_14 = arith.constant 1.000000e+00 : f32
    %19 = vector.broadcast %cst_14 : f32 to vector<64x128xf32>
    %20 = arith.addf %18, %19 : vector<64x128xf32>
    %21 = arith.mulf %17, %20 : vector<64x128xf32>
    %cst_15 = arith.constant 0.000000e+00 : f32
    %22 = vector.broadcast %cst_15 : f32 to vector<64x128xf32>
    %23 = arith.cmpf ogt, %12, %22 : vector<64x128xf32>
    %24 = arith.select %23, %12, %21 : vector<64x128xi1>, vector<64x128xf32>
    %c0_16 = arith.constant 0 : index
    %c0_17 = arith.constant 0 : index
    %25 = vector.load %arg7[%c0_16, %c0_17] : memref<128x128xf32, #tpu.memory_space<vmem>>, vector<128x128xf32>
    %cst_18 = arith.constant dense<0.000000e+00> : vector<64x128xf32>
    %26 = tpu.matmul %24, %25, %cst_18 {dimension_numbers = #tpu.dot_dimension_numbers<[1], [0], [0], [1], [0, 0, 1, 1], [], []>} : vector<64x128xf32>, vector<128x128xf32>, vector<64x128xf32> -> vector<64x128xf32>
    %c0_19 = arith.constant 0 : index
    %c0_20 = arith.constant 0 : index
    %27 = vector.load %arg8[%c0_19, %c0_20] : memref<1x128xf32, #tpu.memory_space<vmem>>, vector<1x128xf32>
    %28 = vector.broadcast %27 : vector<1x128xf32> to vector<64x128xf32>
    %29 = arith.addf %26, %28 : vector<64x128xf32>
    %cst_21 = arith.constant 0.000000e+00 : f32
    %30 = vector.broadcast %cst_21 : f32 to vector<64x128xf32>
    %31 = arith.minimumf %29, %30 : vector<64x128xf32>
    %cst_22 = arith.constant 5.000000e-01 : f32
    %32 = vector.broadcast %cst_22 : f32 to vector<64x128xf32>
    %33 = arith.mulf %32, %31 : vector<64x128xf32>
    %34 = math.tanh %33 : vector<64x128xf32>
    %35 = math.exp %31 : vector<64x128xf32>
    %cst_23 = arith.constant 1.000000e+00 : f32
    %36 = vector.broadcast %cst_23 : f32 to vector<64x128xf32>
    %37 = arith.addf %35, %36 : vector<64x128xf32>
    %38 = arith.mulf %34, %37 : vector<64x128xf32>
    %cst_24 = arith.constant 0.000000e+00 : f32
    %39 = vector.broadcast %cst_24 : f32 to vector<64x128xf32>
    %40 = arith.cmpf ogt, %29, %39 : vector<64x128xf32>
    %41 = arith.select %40, %29, %38 : vector<64x128xi1>, vector<64x128xf32>
    %c0_25 = arith.constant 0 : index
    %c0_26 = arith.constant 0 : index
    %42 = vector.load %arg9[%c0_25, %c0_26] : memref<128x128xf32, #tpu.memory_space<vmem>>, vector<128x128xf32>
    %cst_27 = arith.constant dense<0.000000e+00> : vector<64x128xf32>
    %43 = tpu.matmul %41, %42, %cst_27 {dimension_numbers = #tpu.dot_dimension_numbers<[1], [0], [0], [1], [0, 0, 1, 1], [], []>} : vector<64x128xf32>, vector<128x128xf32>, vector<64x128xf32> -> vector<64x128xf32>
    %c0_28 = arith.constant 0 : index
    %c0_29 = arith.constant 0 : index
    %44 = vector.load %arg10[%c0_28, %c0_29] : memref<1x128xf32, #tpu.memory_space<vmem>>, vector<1x128xf32>
    %45 = vector.broadcast %44 : vector<1x128xf32> to vector<64x128xf32>
    %46 = arith.addf %43, %45 : vector<64x128xf32>
    %cst_30 = arith.constant 0.000000e+00 : f32
    %47 = vector.broadcast %cst_30 : f32 to vector<64x128xf32>
    %48 = arith.minimumf %46, %47 : vector<64x128xf32>
    %cst_31 = arith.constant 5.000000e-01 : f32
    %49 = vector.broadcast %cst_31 : f32 to vector<64x128xf32>
    %50 = arith.mulf %49, %48 : vector<64x128xf32>
    %51 = math.tanh %50 : vector<64x128xf32>
    %52 = math.exp %48 : vector<64x128xf32>
    %cst_32 = arith.constant 1.000000e+00 : f32
    %53 = vector.broadcast %cst_32 : f32 to vector<64x128xf32>
    %54 = arith.addf %52, %53 : vector<64x128xf32>
    %55 = arith.mulf %51, %54 : vector<64x128xf32>
    %cst_33 = arith.constant 0.000000e+00 : f32
    %56 = vector.broadcast %cst_33 : f32 to vector<64x128xf32>
    %57 = arith.cmpf ogt, %46, %56 : vector<64x128xf32>
    %58 = arith.select %57, %46, %55 : vector<64x128xi1>, vector<64x128xf32>
    %c0_34 = arith.constant 0 : index
    %c0_35 = arith.constant 0 : index
    %59 = vector.load %arg11[%c0_34, %c0_35] : memref<128x128xf32, #tpu.memory_space<vmem>>, vector<128x128xf32>
    %cst_36 = arith.constant dense<0.000000e+00> : vector<64x128xf32>
    %60 = tpu.matmul %58, %59, %cst_36 {dimension_numbers = #tpu.dot_dimension_numbers<[1], [0], [0], [1], [0, 0, 1, 1], [], []>} : vector<64x128xf32>, vector<128x128xf32>, vector<64x128xf32> -> vector<64x128xf32>
    %c0_37 = arith.constant 0 : index
    %c0_38 = arith.constant 0 : index
    %61 = vector.load %arg12[%c0_37, %c0_38] : memref<1x128xf32, #tpu.memory_space<vmem>>, vector<1x128xf32>
    %62 = vector.broadcast %61 : vector<1x128xf32> to vector<64x128xf32>
    %63 = arith.addf %60, %62 : vector<64x128xf32>
    %cst_39 = arith.constant 0.000000e+00 : f32
    %64 = vector.broadcast %cst_39 : f32 to vector<64x128xf32>
    %65 = arith.minimumf %63, %64 : vector<64x128xf32>
    %cst_40 = arith.constant 5.000000e-01 : f32
    %66 = vector.broadcast %cst_40 : f32 to vector<64x128xf32>
    %67 = arith.mulf %66, %65 : vector<64x128xf32>
    %68 = math.tanh %67 : vector<64x128xf32>
    %69 = math.exp %65 : vector<64x128xf32>
    %cst_41 = arith.constant 1.000000e+00 : f32
    %70 = vector.broadcast %cst_41 : f32 to vector<64x128xf32>
    %71 = arith.addf %69, %70 : vector<64x128xf32>
    %72 = arith.mulf %68, %71 : vector<64x128xf32>
    %cst_42 = arith.constant 0.000000e+00 : f32
    %73 = vector.broadcast %cst_42 : f32 to vector<64x128xf32>
    %74 = arith.cmpf ogt, %63, %73 : vector<64x128xf32>
    %75 = arith.select %74, %63, %72 : vector<64x128xi1>, vector<64x128xf32>
    %c0_43 = arith.constant 0 : index
    %c0_44 = arith.constant 0 : index
    %76 = vector.load %arg13[%c0_43, %c0_44] : memref<4x128xf32, #tpu.memory_space<vmem>>, vector<4x128xf32>
    %cst_45 = arith.constant dense<0.000000e+00> : vector<4x64xf32>
    %77 = tpu.matmul %76, %75, %cst_45 {dimension_numbers = #tpu.dot_dimension_numbers<[1], [1], [0], [0], [0, 0, 1, 0], [], []>} : vector<4x128xf32>, vector<64x128xf32>, vector<4x64xf32> -> vector<4x64xf32>
    %c0_46 = arith.constant 0 : index
    %c0_47 = arith.constant 0 : index
    %78 = vector.load %arg14[%c0_46, %c0_47] : memref<4x1xf32, #tpu.memory_space<vmem>>, vector<4x1xf32>
    %79 = vector.broadcast %78 : vector<4x1xf32> to vector<4x64xf32>
    %80 = arith.addf %77, %79 : vector<4x64xf32>
    %c0_48 = arith.constant 0 : index
    %c0_49 = arith.constant 0 : index
    %c0_50 = arith.constant 0 : index
    %81 = vector.load %arg15[%c0_48, %c0_49, %c0_50] : memref<1x4x64xf32, #tpu.memory_space<vmem>>, vector<1x4x64xf32>
    %82 = vector.shape_cast %81 : vector<1x4x64xf32> to vector<4x64xf32>
    %83 = vector.shape_cast %80 : vector<4x64xf32> to vector<1x4x64xf32>
    tpu.vector_store %arg15[%c0_48, %c0_49, %c0_50], %83 {strides = array<i32>} : memref<1x4x64xf32, #tpu.memory_space<vmem>>, vector<1x4x64xf32>,
    return
  }
  func.func @transform_0(%arg0: i32, %arg1: i32) -> (i32, i32, i32) {
    %c0_i32 = arith.constant 0 : i32
    %c0_i32_0 = arith.constant 0 : i32
    return %arg0, %arg1, %c0_i32 : i32, i32, i32
  }
  func.func @transform_1(%arg0: i32, %arg1: i32) -> (i32, i32, i32) {
    %c0_i32 = arith.constant 0 : i32
    %c0_i32_0 = arith.constant 0 : i32
    %c0_i32_1 = arith.constant 0 : i32
    return %arg0, %c0_i32, %c0_i32_0 : i32, i32, i32
  }
  func.func @transform_2(%arg0: i32, %arg1: i32) -> (i32, i32) {
    %c0_i32 = arith.constant 0 : i32
    %c0_i32_0 = arith.constant 0 : i32
    %c0_i32_1 = arith.constant 0 : i32
    return %c0_i32, %c0_i32_0 : i32, i32
  }
  func.func @transform_3(%arg0: i32, %arg1: i32) -> (i32, i32) {
    %c0_i32 = arith.constant 0 : i32
    %c0_i32_0 = arith.constant 0 : i32
    %c0_i32_1 = arith.constant 0 : i32
    return %c0_i32, %c0_i32_0 : i32, i32
  }
  func.func @transform_4(%arg0: i32, %arg1: i32) -> (i32, i32) {
    %c0_i32 = arith.constant 0 : i32
    %c0_i32_0 = arith.constant 0 : i32
    %c0_i32_1 = arith.constant 0 : i32
    return %c0_i32, %c0_i32_0 : i32, i32
  }
  func.func @transform_5(%arg0: i32, %arg1: i32) -> (i32, i32) {
    %c0_i32 = arith.constant 0 : i32
    %c0_i32_0 = arith.constant 0 : i32
    %c0_i32_1 = arith.constant 0 : i32
    return %c0_i32, %c0_i32_0 : i32, i32
  }
  func.func @transform_6(%arg0: i32, %arg1: i32) -> (i32, i32) {
    %c0_i32 = arith.constant 0 : i32
    %c0_i32_0 = arith.constant 0 : i32
    %c0_i32_1 = arith.constant 0 : i32
    return %c0_i32, %c0_i32_0 : i32, i32
  }
  func.func @transform_7(%arg0: i32, %arg1: i32) -> (i32, i32) {
    %c0_i32 = arith.constant 0 : i32
    %c0_i32_0 = arith.constant 0 : i32
    %c0_i32_1 = arith.constant 0 : i32
    return %c0_i32, %c0_i32_0 : i32, i32
  }
  func.func @transform_8(%arg0: i32, %arg1: i32) -> (i32, i32) {
    %c0_i32 = arith.constant 0 : i32
    %c0_i32_0 = arith.constant 0 : i32
    %c0_i32_1 = arith.constant 0 : i32
    return %c0_i32, %c0_i32_0 : i32, i32
  }
  func.func @transform_9(%arg0: i32, %arg1: i32) -> (i32, i32) {
    %c0_i32 = arith.constant 0 : i32
    %c0_i32_0 = arith.constant 0 : i32
    %c0_i32_1 = arith.constant 0 : i32
    return %c0_i32, %c0_i32_0 : i32, i32
  }
  func.func @transform_10(%arg0: i32, %arg1: i32) -> (i32, i32) {
    %c0_i32 = arith.constant 0 : i32
    %c0_i32_0 = arith.constant 0 : i32
    %c0_i32_1 = arith.constant 0 : i32
    return %c0_i32, %c0_i32_0 : i32, i32
  }
  func.func @transform_11(%arg0: i32, %arg1: i32) -> (i32, i32) {
    %c0_i32 = arith.constant 0 : i32
    %c0_i32_0 = arith.constant 0 : i32
    %c0_i32_1 = arith.constant 0 : i32
    return %c0_i32, %c0_i32_0 : i32, i32
  }
  func.func @transform_12(%arg0: i32, %arg1: i32) -> (i32, i32) {
    %c0_i32 = arith.constant 0 : i32
    %c0_i32_0 = arith.constant 0 : i32
    %c0_i32_1 = arith.constant 0 : i32
    return %c0_i32, %c0_i32_0 : i32, i32
  }
  func.func @transform_13(%arg0: i32, %arg1: i32) -> (i32, i32, i32) {
    %c0_i32 = arith.constant 0 : i32
    %c0_i32_0 = arith.constant 0 : i32
    return %arg0, %c0_i32, %arg1 : i32, i32, i32
  }
}

</mosaic_0001>

<llo_original>
// kernel: crom_forward.1
$region0: #{crom_forward.1}
  #allocation0 [shape = 'u32[]', space=smem, size = 0x4, offset = 0x4, fixed_abs, tag = 'smem constant byte address 0x4 - core index']
  #allocation1 [shape = 'u32[144,128]{1,0:T(1,128)}', space=vmem, size = 0x12000, scoped, tag = 'internal scratch']
  %s0 = inlined_call_operand.vmem [shape: f32[2,64,3], index: 0, kind: input, shape index: {}]
  %s1 = inlined_call_operand.vmem [shape: f32[2,1,8], index: 1, kind: input, shape index: {}]
  %s2 = inlined_call_operand.vmem [shape: f32[3,128], index: 2, kind: input, shape index: {}]
  %s3 = inlined_call_operand.vmem [shape: f32[8,128], index: 3, kind: input, shape index: {}]
  %s4 = inlined_call_operand.vmem [shape: f32[1,128], index: 4, kind: input, shape index: {}]
  %s5 = inlined_call_operand.vmem [shape: f32[128,128], index: 5, kind: input, shape index: {}]
  %s6 = inlined_call_operand.vmem [shape: f32[1,128], index: 6, kind: input, shape index: {}]
  %s7 = inlined_call_operand.vmem [shape: f32[128,128], index: 7, kind: input, shape index: {}]
  %s8 = inlined_call_operand.vmem [shape: f32[1,128], index: 8, kind: input, shape index: {}]
  %s9 = inlined_call_operand.vmem [shape: f32[128,128], index: 9, kind: input, shape index: {}]
  %s10 = inlined_call_operand.vmem [shape: f32[1,128], index: 10, kind: input, shape index: {}]
  %s11 = inlined_call_operand.vmem [shape: f32[4,128], index: 11, kind: input, shape index: {}]
  %s12 = inlined_call_operand.vmem [shape: f32[4,1], index: 12, kind: input, shape index: {}]
  %s13 = inlined_call_operand.vmem [shape: f32[2,4,64], index: 13, kind: output, shape index: {}]
  %s14 = sld [smem:[#allocation0]]
  $region85: #{crom_forward.1} parent=0
    _
  %s16 = ssub.s32 1, %s14
  %s17 = scalar_select 0, %s16, %s14
  loop: start=0, step=1, limit=4
  $region2: #{crom_forward.1} parent=0 // loop_pre_header
    _
  $region3: #{crom_forward.1} parent=0 // loop_header
    %s19 = sphi 0, %s23
    %p20 = scmp.ge.s32.totalorder %s19, 4
    %s26 = sphi 0, %s38
    %s27 = sphi 0, %s34
    %s28 = sphi 0, %s26
    %s29 = sphi 0, %s27
    %s30 = sphi 0, %s28
    %s31 = sphi 0, %s29
    %s43 = sphi 0, %s45
    %s46 = sphi 0, %s43
    %s47 = sphi 0, %s46
    %s63 = sphi 0, %s47
    %s69 = sphi 0, %s71
    %s72 = sphi 0, %s69
    %s73 = sphi 0, %s72
    %s89 = sphi 0, %s73
    %s93 = sphi 0, %s93
    %s95 = sphi 0, %s93
    %s96 = sphi 0, %s95
    %s110 = sphi 0, %s96
    %s114 = sphi 0, %s114
    %s116 = sphi 0, %s114
    %s117 = sphi 0, %s116
    %s131 = sphi 0, %s117
    %s135 = sphi 0, %s135
    %s137 = sphi 0, %s135
    %s138 = sphi 0, %s137
    %s152 = sphi 0, %s138
    %s156 = sphi 0, %s156
    %s158 = sphi 0, %s156
    %s159 = sphi 0, %s158
    %s173 = sphi 0, %s159
    %s177 = sphi 0, %s177
    %s179 = sphi 0, %s177
    %s180 = sphi 0, %s179
    %s194 = sphi 0, %s180
    %s198 = sphi 0, %s198
    %s200 = sphi 0, %s198
    %s201 = sphi 0, %s200
    %s215 = sphi 0, %s201
    %s219 = sphi 0, %s219
    %s221 = sphi 0, %s219
    %s222 = sphi 0, %s221
    %s236 = sphi 0, %s222
    %s240 = sphi 0, %s240
    %s242 = sphi 0, %s240
    %s243 = sphi 0, %s242
    %s257 = sphi 0, %s243
    %s261 = sphi 0, %s261
    %s263 = sphi 0, %s261
    %s264 = sphi 0, %s263
    %s278 = sphi 0, %s264
    %s282 = sphi 0, %s282
    %s284 = sphi 0, %s282
    %s285 = sphi 0, %s284
    %s299 = sphi 0, %s285
    %s303 = sphi 0, %s303
    %s305 = sphi 0, %s303
    %s306 = sphi 0, %s305
    %s320 = sphi 0, %s306
    %s328 = sphi 0, %s330
    %s331 = sphi 0, %s328
    %s332 = sphi 0, %s331
    %s348 = sphi 0, %s332
  $region4: #{crom_forward.1} parent=0 // loop_header_branch
    %22 = sbr.rel (%p20) target = $region8
  $region5: #{crom_forward.1} parent=0 // loop_body
    %s24 = ssub.s32 %s19, 1
    %s25 = ssub.s32 %s19, 2
    %s32 = sadd.s32 1, %s27
    %p33 = scmp.ge.s32.totalorder %s32, 1
    %s34 = scalar_select %p33, 0, %s32
    %s35 = sadd.s32 1, %s26
    %s36 = scalar_select %p33, %s35, %s26
    %p37 = scmp.ge.s32.totalorder %s36, 2
    %s38 = scalar_select %p37, 0, %s36
    %s39 = ssub.s32 %s26, %s38
    %s40 = ssub.s32 %s27, %s34
    %s41 = sor.u32 %s39, %s40
    %p42 = scmp.eq.s32.totalorder %s41, 0
    %s44 = sadd.s32 %s43, 1
    %s45 = scalar_select %p42, %s43, %s44
    %p48 = pneg %p42
    %p49 = scmp.eq.s32.totalorder %s19, 1
    %p50 = por %p48, %p49
    %p51 = scmp.ne.s32.totalorder %s43, %s46
    %p52 = scmp.eq.s32.totalorder %s19, 0
    %p53 = por %p51, %p52
    %p54 = scmp.ne.s32.totalorder %s43, %s46
    %p55 = scmp.eq.s32.totalorder %s24, 1
    %p56 = por %p54, %p55
    %p57 = scmp.ne.s32.totalorder %s46, %s47
    %p58 = scmp.eq.s32.totalorder %s24, 0
    %p59 = por %p57, %p58
    %p60 = scmp.ne.s32.totalorder %s46, %s47
    %p61 = scmp.eq.s32.totalorder %s25, 1
    %p62 = por %p60, %p61
    %p64 = scmp.ne.s32.totalorder %s47, %s63
    %p65 = scmp.eq.s32.totalorder %s25, 0
    %p66 = por %p64, %p65
    %s67 = ssub.s32 %s26, %s38
    %p68 = scmp.eq.s32.totalorder %s67, 0
    %s70 = sadd.s32 %s69, 1
    %s71 = scalar_select %p68, %s69, %s70
    %p74 = pneg %p68
    %p75 = scmp.eq.s32.totalorder %s19, 1
    %p76 = por %p74, %p75
    %p77 = scmp.ne.s32.totalorder %s69, %s72
    %p78 = scmp.eq.s32.totalorder %s19, 0
    %p79 = por %p77, %p78
    %p80 = scmp.ne.s32.totalorder %s69, %s72
    %p81 = scmp.eq.s32.totalorder %s24, 1
    %p82 = por %p80, %p81
    %p83 = scmp.ne.s32.totalorder %s72, %s73
    %p84 = scmp.eq.s32.totalorder %s24, 0
    %p85 = por %p83, %p84
    %p86 = scmp.ne.s32.totalorder %s72, %s73
    %p87 = scmp.eq.s32.totalorder %s25, 1
    %p88 = por %p86, %p87
    %p90 = scmp.ne.s32.totalorder %s73, %s89
    %p91 = scmp.eq.s32.totalorder %s25, 0
    %p92 = por %p90, %p91
    %s94 = sadd.s32 %s93, 1
    %p97 = scmp.eq.s32.totalorder %s19, 1
    %p98 = scmp.ne.s32.totalorder %s93, %s95
    %p99 = scmp.eq.s32.totalorder %s19, 0
    %p100 = por %p98, %p99
    %p101 = scmp.ne.s32.totalorder %s93, %s95
    %p102 = scmp.eq.s32.totalorder %s24, 1
    %p103 = por %p101, %p102
    %p104 = scmp.ne.s32.totalorder %s95, %s96
    %p105 = scmp.eq.s32.totalorder %s24, 0
    %p106 = por %p104, %p105
    %p107 = scmp.ne.s32.totalorder %s95, %s96
    %p108 = scmp.eq.s32.totalorder %s25, 1
    %p109 = por %p107, %p108
    %p111 = scmp.ne.s32.totalorder %s96, %s110
    %p112 = scmp.eq.s32.totalorder %s25, 0
    %p113 = por %p111, %p112
    %s115 = sadd.s32 %s114, 1
    %p118 = scmp.eq.s32.totalorder %s19, 1
    %p119 = scmp.ne.s32.totalorder %s114, %s116
    %p120 = scmp.eq.s32.totalorder %s19, 0
    %p121 = por %p119, %p120
    %p122 = scmp.ne.s32.totalorder %s114, %s116
    %p123 = scmp.eq.s32.totalorder %s24, 1
    %p124 = por %p122, %p123
    %p125 = scmp.ne.s32.totalorder %s116, %s117
    %p126 = scmp.eq.s32.totalorder %s24, 0
    %p127 = por %p125, %p126
    %p128 = scmp.ne.s32.totalorder %s116, %s117
    %p129 = scmp.eq.s32.totalorder %s25, 1
    %p130 = por %p128, %p129
    %p132 = scmp.ne.s32.totalorder %s117, %s131
    %p133 = scmp.eq.s32.totalorder %s25, 0
    %p134 = por %p132, %p133
    %s136 = sadd.s32 %s135, 1
    %p139 = scmp.eq.s32.totalorder %s19, 1
    %p140 = scmp.ne.s32.totalorder %s135, %s137
    %p141 = scmp.eq.s32.totalorder %s19, 0
    %p142 = por %p140, %p141
    %p143 = scmp.ne.s32.totalorder %s135, %s137
    %p144 = scmp.eq.s32.totalorder %s24, 1
    %p145 = por %p143, %p144
    %p146 = scmp.ne.s32.totalorder %s137, %s138
    %p147 = scmp.eq.s32.totalorder %s24, 0
    %p148 = por %p146, %p147
    %p149 = scmp.ne.s32.totalorder %s137, %s138
    %p150 = scmp.eq.s32.totalorder %s25, 1
    %p151 = por %p149, %p150
    %p153 = scmp.ne.s32.totalorder %s138, %s152
    %p154 = scmp.eq.s32.totalorder %s25, 0
    %p155 = por %p153, %p154
    %s157 = sadd.s32 %s156, 1
    %p160 = scmp.eq.s32.totalorder %s19, 1
    %p161 = scmp.ne.s32.totalorder %s156, %s158
    %p162 = scmp.eq.s32.totalorder %s19, 0
    %p163 = por %p161, %p162
    %p164 = scmp.ne.s32.totalorder %s156, %s158
    %p165 = scmp.eq.s32.totalorder %s24, 1
    %p166 = por %p164, %p165
    %p167 = scmp.ne.s32.totalorder %s158, %s159
    %p168 = scmp.eq.s32.totalorder %s24, 0
    %p169 = por %p167, %p168
    %p170 = scmp.ne.s32.totalorder %s158, %s159
    %p171 = scmp.eq.s32.totalorder %s25, 1
    %p172 = por %p170, %p171
    %p174 = scmp.ne.s32.totalorder %s159, %s173
    %p175 = scmp.eq.s32.totalorder %s25, 0
    %p176 = por %p174, %p175
    %s178 = sadd.s32 %s177, 1
    %p181 = scmp.eq.s32.totalorder %s19, 1
    %p182 = scmp.ne.s32.totalorder %s177, %s179
    %p183 = scmp.eq.s32.totalorder %s19, 0
    %p184 = por %p182, %p183
    %p185 = scmp.ne.s32.totalorder %s177, %s179
    %p186 = scmp.eq.s32.totalorder %s24, 1
    %p187 = por %p185, %p186
    %p188 = scmp.ne.s32.totalorder %s179, %s180
    %p189 = scmp.eq.s32.totalorder %s24, 0
    %p190 = por %p188, %p189
    %p191 = scmp.ne.s32.totalorder %s179, %s180
    %p192 = scmp.eq.s32.totalorder %s25, 1
    %p193 = por %p191, %p192
    %p195 = scmp.ne.s32.totalorder %s180, %s194
    %p196 = scmp.eq.s32.totalorder %s25, 0
    %p197 = por %p195, %p196
    %s199 = sadd.s32 %s198, 1
    %p202 = scmp.eq.s32.totalorder %s19, 1
    %p203 = scmp.ne.s32.totalorder %s198, %s200
    %p204 = scmp.eq.s32.totalorder %s19, 0
    %p205 = por %p203, %p204
    %p206 = scmp.ne.s32.totalorder %s198, %s200
    %p207 = scmp.eq.s32.totalorder %s24, 1
    %p208 = por %p206, %p207
    %p209 = scmp.ne.s32.totalorder %s200, %s201
    %p210 = scmp.eq.s32.totalorder %s24, 0
    %p211 = por %p209, %p210
    %p212 = scmp.ne.s32.totalorder %s200, %s201
    %p213 = scmp.eq.s32.totalorder %s25, 1
    %p214 = por %p212, %p213
    %p216 = scmp.ne.s32.totalorder %s201, %s215
    %p217 = scmp.eq.s32.totalorder %s25, 0
    %p218 = por %p216, %p217
    %s220 = sadd.s32 %s219, 1
    %p223 = scmp.eq.s32.totalorder %s19, 1
    %p224 = scmp.ne.s32.totalorder %s219, %s221
    %p225 = scmp.eq.s32.totalorder %s19, 0
    %p226 = por %p224, %p225
    %p227 = scmp.ne.s32.totalorder %s219, %s221
    %p228 = scmp.eq.s32.totalorder %s24, 1
    %p229 = por %p227, %p228
    %p230 = scmp.ne.s32.totalorder %s221, %s222
    %p231 = scmp.eq.s32.totalorder %s24, 0
    %p232 = por %p230, %p231
    %p233 = scmp.ne.s32.totalorder %s221, %s222
    %p234 = scmp.eq.s32.totalorder %s25, 1
    %p235 = por %p233, %p234
    %p237 = scmp.ne.s32.totalorder %s222, %s236
    %p238 = scmp.eq.s32.totalorder %s25, 0
    %p239 = por %p237, %p238
    %s241 = sadd.s32 %s240, 1
    %p244 = scmp.eq.s32.totalorder %s19, 1
    %p245 = scmp.ne.s32.totalorder %s240, %s242
    %p246 = scmp.eq.s32.totalorder %s19, 0
    %p247 = por %p245, %p246
    %p248 = scmp.ne.s32.totalorder %s240, %s242
    %p249 = scmp.eq.s32.totalorder %s24, 1
    %p250 = por %p248, %p249
    %p251 = scmp.ne.s32.totalorder %s242, %s243
    %p252 = scmp.eq.s32.totalorder %s24, 0
    %p253 = por %p251, %p252
    %p254 = scmp.ne.s32.totalorder %s242, %s243
    %p255 = scmp.eq.s32.totalorder %s25, 1
    %p256 = por %p254, %p255
    %p258 = scmp.ne.s32.totalorder %s243, %s257
    %p259 = scmp.eq.s32.totalorder %s25, 0
    %p260 = por %p258, %p259
    %s262 = sadd.s32 %s261, 1
    %p265 = scmp.eq.s32.totalorder %s19, 1
    %p266 = scmp.ne.s32.totalorder %s261, %s263
    %p267 = scmp.eq.s32.totalorder %s19, 0
    %p268 = por %p266, %p267
    %p269 = scmp.ne.s32.totalorder %s261, %s263
    %p270 = scmp.eq.s32.totalorder %s24, 1
    %p271 = por %p269, %p270
    %p272 = scmp.ne.s32.totalorder %s263, %s264
    %p273 = scmp.eq.s32.totalorder %s24, 0
    %p274 = por %p272, %p273
    %p275 = scmp.ne.s32.totalorder %s263, %s264
    %p276 = scmp.eq.s32.totalorder %s25, 1
    %p277 = por %p275, %p276
    %p279 = scmp.ne.s32.totalorder %s264, %s278
    %p280 = scmp.eq.s32.totalorder %s25, 0
    %p281 = por %p279, %p280
    %s283 = sadd.s32 %s282, 1
    %p286 = scmp.eq.s32.totalorder %s19, 1
    %p287 = scmp.ne.s32.totalorder %s282, %s284
    %p288 = scmp.eq.s32.totalorder %s19, 0
    %p289 = por %p287, %p288
    %p290 = scmp.ne.s32.totalorder %s282, %s284
    %p291 = scmp.eq.s32.totalorder %s24, 1
    %p292 = por %p290, %p291
    %p293 = scmp.ne.s32.totalorder %s284, %s285
    %p294 = scmp.eq.s32.totalorder %s24, 0
    %p295 = por %p293, %p294
    %p296 = scmp.ne.s32.totalorder %s284, %s285
    %p297 = scmp.eq.s32.totalorder %s25, 1
    %p298 = por %p296, %p297
    %p300 = scmp.ne.s32.totalorder %s285, %s299
    %p301 = scmp.eq.s32.totalorder %s25, 0
    %p302 = por %p300, %p301
    %s304 = sadd.s32 %s303, 1
    %p307 = scmp.eq.s32.totalorder %s19, 1
    %p308 = scmp.ne.s32.totalorder %s303, %s305
    %p309 = scmp.eq.s32.totalorder %s19, 0
    %p310 = por %p308, %p309
    %p311 = scmp.ne.s32.totalorder %s303, %s305
    %p312 = scmp.eq.s32.totalorder %s24, 1
    %p313 = por %p311, %p312
    %p314 = scmp.ne.s32.totalorder %s305, %s306
    %p315 = scmp.eq.s32.totalorder %s24, 0
    %p316 = por %p314, %p315
    %p317 = scmp.ne.s32.totalorder %s305, %s306
    %p318 = scmp.eq.s32.totalorder %s25, 1
    %p319 = por %p317, %p318
    %p321 = scmp.ne.s32.totalorder %s306, %s320
    %p322 = scmp.eq.s32.totalorder %s25, 0
    %p323 = por %p321, %p322
    %s324 = ssub.s32 %s26, %s38
    %s325 = ssub.s32 %s27, %s34
    %s326 = sor.u32 %s324, %s325
    %p327 = scmp.eq.s32.totalorder %s326, 0
    %s329 = sadd.s32 %s328, 1
    %s330 = scalar_select %p327, %s328, %s329
    %p333 = pneg %p327
    %p334 = scmp.eq.s32.totalorder %s19, 1
    %p335 = por %p333, %p334
    %p336 = scmp.ne.s32.totalorder %s328, %s331
    %p337 = scmp.eq.s32.totalorder %s19, 0
    %p338 = por %p336, %p337
    %p339 = scmp.ne.s32.totalorder %s328, %s331
    %p340 = scmp.eq.s32.totalorder %s24, 1
    %p341 = por %p339, %p340
    %p342 = scmp.ne.s32.totalorder %s331, %s332
    %p343 = scmp.eq.s32.totalorder %s24, 0
    %p344 = por %p342, %p343
    %p345 = scmp.ne.s32.totalorder %s331, %s332
    %p346 = scmp.eq.s32.totalorder %s25, 1
    %p347 = por %p345, %p346
    %p349 = scmp.ne.s32.totalorder %s332, %s348
    %p350 = scmp.eq.s32.totalorder %s25, 0
    %p351 = por %p349, %p350
    %p352 = scmp.le.s32.totalorder 1, %s19
    %p353 = scmp.lt.s32.totalorder %s19, 3
    %p354 = pnand %p352, %p353
    %p355 = pneg %p354
    // Predicated region
    $region9: #{crom_forward.1} parent=5 // pred_check
      _
    $region10: #{crom_forward.1} parent=5 // pred_check_branch
      %357 = sbr.rel (%p354) target = $region12
    $region11: #{crom_forward.1} parent=5 // pred_region
      %s358 = ssub.s32 %s19, 1
      // Predicated region
      $region13: #{crom_forward.1} parent=11 // pred_check
        %p359 = pneg %p106
      $region14: #{crom_forward.1} parent=11 // pred_check_branch
        %361 = sbr.rel (%p359) target = $region16
      $region15: #{crom_forward.1} parent=11 // pred_region
        _
      $region16: #{crom_forward.1} parent=11 // pred_fallthru
        _
      // Predicated region
      $region17: #{crom_forward.1} parent=11 // pred_check
        %p362 = pneg %p127
      $region18: #{crom_forward.1} parent=11 // pred_check_branch
        %364 = sbr.rel (%p362) target = $region20
      $region19: #{crom_forward.1} parent=11 // pred_region
        _
      $region20: #{crom_forward.1} parent=11 // pred_fallthru
        _
      // Predicated region
      $region21: #{crom_forward.1} parent=11 // pred_check
        %p365 = pneg %p148
      $region22: #{crom_forward.1} parent=11 // pred_check_branch
        %367 = sbr.rel (%p365) target = $region24
      $region23: #{crom_forward.1} parent=11 // pred_region
        _
      $region24: #{crom_forward.1} parent=11 // pred_fallthru
        _
      // Predicated region
      $region25: #{crom_forward.1} parent=11 // pred_check
        %p368 = pneg %p169
      $region26: #{crom_forward.1} parent=11 // pred_check_branch
        %370 = sbr.rel (%p368) target = $region28
      $region27: #{crom_forward.1} parent=11 // pred_region
        _
      $region28: #{crom_forward.1} parent=11 // pred_fallthru
        _
      // Predicated region
      $region29: #{crom_forward.1} parent=11 // pred_check
        %p371 = pneg %p190
      $region30: #{crom_forward.1} parent=11 // pred_check_branch
        %373 = sbr.rel (%p371) target = $region32
      $region31: #{crom_forward.1} parent=11 // pred_region
        _
      $region32: #{crom_forward.1} parent=11 // pred_fallthru
        _
      // Predicated region
      $region33: #{crom_forward.1} parent=11 // pred_check
        %p374 = pneg %p211
      $region34: #{crom_forward.1} parent=11 // pred_check_branch
        %376 = sbr.rel (%p374) target = $region36
      $region35: #{crom_forward.1} parent=11 // pred_region
        _
      $region36: #{crom_forward.1} parent=11 // pred_fallthru
        _
      // Predicated region
      $region37: #{crom_forward.1} parent=11 // pred_check
        %p377 = pneg %p232
      $region38: #{crom_forward.1} parent=11 // pred_check_branch
        %379 = sbr.rel (%p377) target = $region40
      $region39: #{crom_forward.1} parent=11 // pred_region
        _
      $region40: #{crom_forward.1} parent=11 // pred_fallthru
        _
      // Predicated region
      $region41: #{crom_forward.1} parent=11 // pred_check
        %p380 = pneg %p253
      $region42: #{crom_forward.1} parent=11 // pred_check_branch
        %382 = sbr.rel (%p380) target = $region44
      $region43: #{crom_forward.1} parent=11 // pred_region
        _
      $region44: #{crom_forward.1} parent=11 // pred_fallthru
        _
      // Predicated region
      $region45: #{crom_forward.1} parent=11 // pred_check
        %p383 = pneg %p274
      $region46: #{crom_forward.1} parent=11 // pred_check_branch
        %385 = sbr.rel (%p383) target = $region48
      $region47: #{crom_forward.1} parent=11 // pred_region
        _
      $region48: #{crom_forward.1} parent=11 // pred_fallthru
        _
      // Predicated region
      $region49: #{crom_forward.1} parent=11 // pred_check
        %p386 = pneg %p295
      $region50: #{crom_forward.1} parent=11 // pred_check_branch
        %388 = sbr.rel (%p386) target = $region52
      $region51: #{crom_forward.1} parent=11 // pred_region
        _
      $region52: #{crom_forward.1} parent=11 // pred_fallthru
        _
      // Predicated region
      $region53: #{crom_forward.1} parent=11 // pred_check
        %p389 = pneg %p316
      $region54: #{crom_forward.1} parent=11 // pred_check_branch
        %391 = sbr.rel (%p389) target = $region56
      $region55: #{crom_forward.1} parent=11 // pred_region
        _
      $region56: #{crom_forward.1} parent=11 // pred_fallthru
        _
    $region12: #{crom_forward.1} parent=5 // pred_fallthru
      _
    %p392 = scmp.lt.s32.totalorder %s19, 2
    // Predicated region
    $region57: #{crom_forward.1} parent=5 // pred_check
      %p393 = pneg %p392
    $region58: #{crom_forward.1} parent=5 // pred_check_branch
      %395 = sbr.rel (%p393) target = $region60
    $region59: #{crom_forward.1} parent=5 // pred_region
      // Predicated region
      $region61: #{crom_forward.1} parent=59 // pred_check
        %p396 = pneg %p53
      $region62: #{crom_forward.1} parent=59 // pred_check_branch
        %398 = sbr.rel (%p396) target = $region64
      $region63: #{crom_forward.1} parent=59 // pred_region
        %s399 = smul.u32 8, %s27
        %p400 = scmp.lt.s32.totalorder %s26, 1
        %s401 = scalar_select %p400, %s26, 1
        %p402 = scmp.lt.s32.totalorder %s399, 7
        %s403 = scalar_select %p402, %s399, 7
        %s404 = smul.addr %s401, 8
        %s405 = sadd.s32 %s403, %s404
        %s406 = smul.addr %s405, 8
        %s407 = scalar_lea.vmem %s0, %s406
        %s408 = smul.u32 8, %s27
      $region64: #{crom_forward.1} parent=59 // pred_fallthru
        _
      // Predicated region
      $region65: #{crom_forward.1} parent=59 // pred_check
        %p409 = pneg %p79
      $region66: #{crom_forward.1} parent=59 // pred_check_branch
        %411 = sbr.rel (%p409) target = $region68
      $region67: #{crom_forward.1} parent=59 // pred_region
        %p412 = scmp.lt.s32.totalorder %s26, 1
        %s413 = scalar_select %p412, %s26, 1
        %s414 = scalar_lea.vmem %s1, %s413
      $region68: #{crom_forward.1} parent=59 // pred_fallthru
        _
    $region60: #{crom_forward.1} parent=5 // pred_fallthru
      _
    %p415 = scmp.le.s32.totalorder 1, %s19
    %p416 = scmp.lt.s32.totalorder %s19, 3
    %p417 = pnand %p415, %p416
    %p418 = pneg %p417
    // Predicated region
    $region69: #{crom_forward.1} parent=5 // pred_check
      _
    $region70: #{crom_forward.1} parent=5 // pred_check_branch
      %420 = sbr.rel (%p417) target = $region72
    $region71: #{crom_forward.1} parent=5 // pred_region
      %s421 = ssub.s32 %s19, 1
      %s422 = smul.u32 8, %s29
      %p423 = scmp.lt.s32.totalorder %s28, 1
      %s424 = scalar_select %p423, %s28, 1
      %p425 = scmp.lt.s32.totalorder %s422, 7
      %s426 = scalar_select %p425, %s422, 7
      %s427 = smul.addr %s424, 8
      %s428 = sadd.s32 %s426, %s427
      %s429 = smul.addr %s428, 8
      %s430 = scalar_lea.vmem %s0, %s429
      %p431 = pneg %p59
      %p432 = pneg %p56
      %p433 = scmp.lt.s32.totalorder %s28, 1
      %s434 = scalar_select %p433, %s28, 1
      %s435 = scalar_lea.vmem %s1, %s434
      %p436 = pneg %p85
      %p437 = pneg %p82
      %p438 = pneg %p106
      %p439 = pneg %p103
      %p440 = pneg %p127
      %p441 = pneg %p124
      %p442 = pneg %p148
      %p443 = pneg %p145
      %p444 = pneg %p169
      %p445 = pneg %p166
      %p446 = pneg %p190
      %p447 = pneg %p187
      %p448 = pneg %p211
      %p449 = pneg %p208
      %p450 = pneg %p232
      %p451 = pneg %p229
      %p452 = pneg %p253
      %p453 = pneg %p250
      %p454 = pneg %p274
      %p455 = pneg %p271
      %p456 = pneg %p295
      %p457 = pneg %p292
      %p458 = pneg %p316
      %p459 = pneg %p313
      %p460 = pneg %p344
      %p461 = pneg %p341
      %p462 = scmp.lt.s32.totalorder %s28, 1
      %s463 = scalar_select %p462, %s28, 1
      %p464 = scmp.lt.s32.totalorder %s29, 0
      %s465 = scalar_select %p464, %s29, 0
      %s466 = sadd.s32 %s465, %s463
      %s467 = smul.addr %s466, 4
      %s468 = scalar_lea.vmem %s13, %s467
      %s469 = smul.u32 8, %s29
      %p470 = scmp.lt.s32.totalorder %s28, 1
      %s471 = scalar_select %p470, %s28, 1
      %p472 = scmp.lt.s32.totalorder %s469, 7
      %s473 = scalar_select %p472, %s469, 7
      %s474 = smul.addr %s471, 8
      %s475 = sadd.s32 %s473, %s474
      %s476 = smul.addr %s475, 8
      %s477 = scalar_lea.vmem %s0, %s476
      %s478 = smul.u32 8, %s29
      %p479 = scmp.lt.s32.totalorder %s28, 1
      %s480 = scalar_select %p479, %s28, 1
      %s481 = scalar_lea.vmem %s1, %s480
      %p482 = scmp.lt.s32.totalorder %s28, 1
      %s483 = scalar_select %p482, %s28, 1
      %p484 = scmp.lt.s32.totalorder %s29, 0
      %s485 = scalar_select %p484, %s29, 0
      %s486 = sadd.s32 %s485, %s483
      %s487 = smul.addr %s486, 4
      %s488 = scalar_lea.vmem %s13, %s487
      %v489 = vld [vmem:[%s477] sm:$0xff]
      %v490 = vld [vmem:[%s477 + $0x8] sm:$0xff]
      %v491 = vld [vmem:[%s477 + $0x10] sm:$0xff]
      %v492 = vld [vmem:[%s477 + $0x18] sm:$0xff]
      %v493 = vld [vmem:[%s477 + $0x20] sm:$0xff]
      %v494 = vld [vmem:[%s477 + $0x28] sm:$0xff]
      %v495 = vld [vmem:[%s477 + $0x30] sm:$0xff]
      %v496 = vld [vmem:[%s477 + $0x38] sm:$0xff]
      %v497 = vld [vmem:[%s2] sm:$0x7]
      %v498 = vld [vmem:[%s481] sm:$0x1]
      %v499 = vld [vmem:[%s3] sm:$0xff]
      %vm500 = vcmask 64512
      %v502 = vsel %vm500, %v498, 0
      %504 = vmatprep.subr.mxu0 0.0
      %505 = vmatpush1.msra.mxu0 %v499
      %506 = vmatprep.subr.mxu0 0.0
      %507 = vmatpush1.msra.mxu0 0.0
      %508 = vmatprep.subr.mxu0 0.0
      %509 = vmatpush1.msra.mxu0 0.0
      %510 = vmatprep.subr.mxu0 0.0
      %511 = vmatpush1.msra.mxu0 0.0
      %512 = vmatprep.subr.mxu0 0.0
      %513 = vmatpush1.msra.mxu0 0.0
      %514 = vmatprep.subr.mxu0 0.0
      %515 = vmatpush1.msra.mxu0 0.0
      %516 = vmatprep.subr.mxu0 0.0
      %517 = vmatpush1.msra.mxu0 0.0
      %518 = vmatprep.subr.mxu0 0.0
      %519 = vmatpush1.msra.mxu0 0.0
      %520 = vmatprep.subr.mxu0 0.0
      %521 = vmatpush1.msra.mxu0 0.0
      %522 = vmatprep.subr.mxu0 0.0
      %523 = vmatpush1.msra.mxu0 0.0
      %524 = vmatprep.subr.mxu0 0.0
      %525 = vmatpush1.msra.mxu0 0.0
      %526 = vmatprep.subr.mxu0 0.0
      %527 = vmatpush1.msra.mxu0 0.0
      %528 = vmatprep.subr.mxu0 0.0
      %529 = vmatpush1.msra.mxu0 0.0
      %530 = vmatprep.subr.mxu0 0.0
      %531 = vmatpush1.msra.mxu0 0.0
      %532 = vmatprep.subr.mxu0 0.0
      %533 = vmatpush1.msra.mxu0 0.0
      %534 = vmatprep.subr.mxu0 0.0
      %535 = vmatpush1.msra.mxu0 0.0
      %536 = vmatprep.subr.mxu0 0.0
      %537 = vmatpush1.msra.mxu0 0.0
      %538 = vmatprep.subr.mxu0 0.0
      %539 = vmatpush1.msra.mxu0 0.0
      %540 = vmatprep.subr.mxu0 0.0
      %541 = vmatpush1.msra.mxu0 0.0
      %542 = vmatprep.subr.mxu0 0.0
      %543 = vmatpush1.msra.mxu0 0.0
      %544 = vmatprep.subr.mxu0 0.0
      %545 = vmatpush1.msra.mxu0 0.0
      %546 = vmatprep.subr.mxu0 0.0
      %547 = vmatpush1.msra.mxu0 0.0
      %548 = vmatprep.subr.mxu0 0.0
      %549 = vmatpush1.msra.mxu0 0.0
      %550 = vmatprep.subr.mxu0 0.0
      %551 = vmatpush1.msra.mxu0 0.0
      %552 = vmatprep.subr.mxu0 0.0
      %553 = vmatpush1.msra.mxu0 0.0
      %554 = vmatprep.subr.mxu0 0.0
      %555 = vmatpush1.msra.mxu0 0.0
      %556 = vmatprep.subr.mxu0 0.0
      %557 = vmatpush1.msra.mxu0 0.0
      %558 = vmatprep.subr.mxu0 0.0
      %559 = vmatpush1.msra.mxu0 0.0
      %560 = vmatprep.subr.mxu0 0.0
      %561 = vmatpush1.msra.mxu0 0.0
      %562 = vmatprep.subr.mxu0 0.0
      %563 = vmatpush1.msra.mxu0 0.0
      %564 = vmatprep.subr.mxu0 0.0
      %565 = vmatpush1.msra.mxu0 0.0
      %566 = vmatprep.subr.mxu0 0.0
      %567 = vmatpush1.msra.mxu0 0.0
      %568 = vmatprep.mubr.f32.mxu0 0.0
      %569 = vmatmul.mubr.f32.gmra.mrb[0].mxu0 %v502
      %v570 = vpop.f32.mrb[0].mxu0
      %v571 = vadd.f32 0.0, %v570
      %v572 = vpop.f32.mrb[0].mxu0
      %573 = vdwg.mxu0
      %v574 = vlaneseq
      %v575 = vshrl.u32 %v574, 7
      %v576 = vsub.s32 0, %v575
      %v577 = vrot.slane %v571, %v576
      %vm578 = vcmask 23552
      %v580 = vsel %vm578, %v489, 0
      %v583 = vsel %vm578, %v490, 0
      %v586 = vsel %vm578, %v491, 0
      %v589 = vsel %vm578, %v492, 0
      %v592 = vsel %vm578, %v493, 0
      %v595 = vsel %vm578, %v494, 0
      %v598 = vsel %vm578, %v495, 0
      %v601 = vsel %vm578, %v496, 0
      %vm603 = vcmask 1042432
      %v605 = vsel %vm603, %v497, 0
      %607 = vmatprep.subr.mxu0 0.0
      %608 = vmatpush1.msra.mxu0 %v605
      %609 = vmatprep.subr.mxu0 0.0
      %610 = vmatpush1.msra.mxu0 0.0
      %611 = vmatprep.subr.mxu0 0.0
      %612 = vmatpush1.msra.mxu0 0.0
      %613 = vmatprep.subr.mxu0 0.0
      %614 = vmatpush1.msra.mxu0 0.0
      %615 = vmatprep.subr.mxu0 0.0
      %616 = vmatpush1.msra.mxu0 0.0
      %617 = vmatprep.subr.mxu0 0.0
      %618 = vmatpush1.msra.mxu0 0.0
      %619 = vmatprep.subr.mxu0 0.0
      %620 = vmatpush1.msra.mxu0 0.0
      %621 = vmatprep.subr.mxu0 0.0
      %622 = vmatpush1.msra.mxu0 0.0
      %623 = vmatprep.subr.mxu0 0.0
      %624 = vmatpush1.msra.mxu0 0.0
      %625 = vmatprep.subr.mxu0 0.0
      %626 = vmatpush1.msra.mxu0 0.0
      %627 = vmatprep.subr.mxu0 0.0
      %628 = vmatpush1.msra.mxu0 0.0
      %629 = vmatprep.subr.mxu0 0.0
      %630 = vmatpush1.msra.mxu0 0.0
      %631 = vmatprep.subr.mxu0 0.0
      %632 = vmatpush1.msra.mxu0 0.0
      %633 = vmatprep.subr.mxu0 0.0
      %634 = vmatpush1.msra.mxu0 0.0
      %635 = vmatprep.subr.mxu0 0.0
      %636 = vmatpush1.msra.mxu0 0.0
      %637 = vmatprep.subr.mxu0 0.0
      %638 = vmatpush1.msra.mxu0 0.0
      %639 = vmatprep.subr.mxu0 0.0
      %640 = vmatpush1.msra.mxu0 0.0
      %641 = vmatprep.subr.mxu0 0.0
      %642 = vmatpush1.msra.mxu0 0.0
      %643 = vmatprep.subr.mxu0 0.0
      %644 = vmatpush1.msra.mxu0 0.0
      %645 = vmatprep.subr.mxu0 0.0
      %646 = vmatpush1.msra.mxu0 0.0
      %647 = vmatprep.subr.mxu0 0.0
      %648 = vmatpush1.msra.mxu0 0.0
      %649 = vmatprep.subr.mxu0 0.0
      %650 = vmatpush1.msra.mxu0 0.0
      %651 = vmatprep.subr.mxu0 0.0
      %652 = vmatpush1.msra.mxu0 0.0
      %653 = vmatprep.subr.mxu0 0.0
      %654 = vmatpush1.msra.mxu0 0.0
      %655 = vmatprep.subr.mxu0 0.0
      %656 = vmatpush1.msra.mxu0 0.0
      %657 = vmatprep.subr.mxu0 0.0
      %658 = vmatpush1.msra.mxu0 0.0
      %659 = vmatprep.subr.mxu0 0.0
      %660 = vmatpush1.msra.mxu0 0.0
      %661 = vmatprep.subr.mxu0 0.0
      %662 = vmatpush1.msra.mxu0 0.0
      %663 = vmatprep.subr.mxu0 0.0
      %664 = vmatpush1.msra.mxu0 0.0
      %665 = vmatprep.subr.mxu0 0.0
      %666 = vmatpush1.msra.mxu0 0.0
      %667 = vmatprep.subr.mxu0 0.0
      %668 = vmatpush1.msra.mxu0 0.0
      %669 = vmatprep.subr.mxu0 0.0
      %670 = vmatpush1.msra.mxu0 0.0
      %671 = vmatprep.mubr.f32.mxu0 0.0
      %672 = vmatmul.mubr.f32.gmra.mrb[0].mxu0 %v580
      %v673 = vpop.f32.mrb[0].mxu0
      %v674 = vadd.f32 %v577, %v673
      %v675 = vpop.f32.mrb[0].mxu0
      %676 = vmatprep.mubr.f32.mxu0 0.0
      %677 = vmatmul.mubr.f32.gmra.mrb[0].mxu0 %v583
      %v678 = vpop.f32.mrb[0].mxu0
      %v679 = vadd.f32 %v577, %v678
      %v680 = vpop.f32.mrb[0].mxu0
      %681 = vmatprep.mubr.f32.mxu0 0.0
      %682 = vmatmul.mubr.f32.gmra.mrb[0].mxu0 %v586
      %v683 = vpop.f32.mrb[0].mxu0
      %v684 = vadd.f32 %v577, %v683
      %v685 = vpop.f32.mrb[0].mxu0
      %686 = vmatprep.mubr.f32.mxu0 0.0
      %687 = vmatmul.mubr.f32.gmra.mrb[0].mxu0 %v589
      %v688 = vpop.f32.mrb[0].mxu0
      %v689 = vadd.f32 %v577, %v688
      %v690 = vpop.f32.mrb[0].mxu0
      %691 = vmatprep.mubr.f32.mxu0 0.0
      %692 = vmatmul.mubr.f32.gmra.mrb[0].mxu0 %v592
      %v693 = vpop.f32.mrb[0].mxu0
      %v694 = vadd.f32 %v577, %v693
      %v695 = vpop.f32.mrb[0].mxu0
      %696 = vmatprep.mubr.f32.mxu0 0.0
      %697 = vmatmul.mubr.f32.gmra.mrb[0].mxu0 %v595
      %v698 = vpop.f32.mrb[0].mxu0
      %v699 = vadd.f32 %v577, %v698
      %v700 = vpop.f32.mrb[0].mxu0
      %701 = vmatprep.mubr.f32.mxu0 0.0
      %702 = vmatmul.mubr.f32.gmra.mrb[0].mxu0 %v598
      %v703 = vpop.f32.mrb[0].mxu0
      %v704 = vadd.f32 %v577, %v703
      %v705 = vpop.f32.mrb[0].mxu0
      %706 = vmatprep.mubr.f32.mxu0 0.0
      %707 = vmatmul.mubr.f32.gmra.mrb[0].mxu0 %v601
      %v708 = vpop.f32.mrb[0].mxu0
      %v709 = vadd.f32 %v577, %v708
      %v710 = vpop.f32.mrb[0].mxu0
      %711 = vdwg.mxu0
      %v712 = vld [vmem:[%s4] sm:$0x1]
      %v714 = vlaneseq
      %v715 = vshrl.u32 %v714, 7
      %v716 = vsub.s32 0, %v715
      %v717 = vrot.slane %v712, %v716
      %v719 = vadd.f32 %v674, %v717
      %v720 = vadd.f32 %v679, %v717
      %v721 = vadd.f32 %v684, %v717
      %v722 = vadd.f32 %v689, %v717
      %v723 = vadd.f32 %v694, %v717
      %v724 = vadd.f32 %v699, %v717
      %v725 = vadd.f32 %v704, %v717
      %v726 = vadd.f32 %v709, %v717
      %v727 = vmin.f32 %v719, 0.0
      %v728 = vmin.f32 %v720, 0.0
      %v729 = vmin.f32 %v721, 0.0
      %v730 = vmin.f32 %v722, 0.0
      %v731 = vmin.f32 %v723, 0.0
      %v732 = vmin.f32 %v724, 0.0
      %v733 = vmin.f32 %v725, 0.0
      %v734 = vmin.f32 %v726, 0.0
      %v735 = vmul.f32 %v727, 0.5
      %v736 = vmul.f32 %v728, 0.5
      %v737 = vmul.f32 %v729, 0.5
      %v738 = vmul.f32 %v730, 0.5
      %v739 = vmul.f32 %v731, 0.5
      %v740 = vmul.f32 %v732, 0.5
      %v741 = vmul.f32 %v733, 0.5
      %v742 = vmul.f32 %v734, 0.5
      %v743 = vtanh.pop %v735
      %v744 = vtanh.pop %v736
      %v745 = vtanh.pop %v737
      %v746 = vtanh.pop %v738
      %v747 = vtanh.pop %v739
      %v748 = vtanh.pop %v740
      %v749 = vtanh.pop %v741
      %v750 = vtanh.pop %v742
      %v751 = vmul.f32 %v727, 1.442695
      %v752 = vpow.pop %v751
      %v753 = vmul.f32 %v728, 1.442695
      %v754 = vpow.pop %v753
      %v755 = vmul.f32 %v729, 1.442695
      %v756 = vpow.pop %v755
      %v757 = vmul.f32 %v730, 1.442695
      %v758 = vpow.pop %v757
      %v759 = vmul.f32 %v731, 1.442695
      %v760 = vpow.pop %v759
      %v761 = vmul.f32 %v732, 1.442695
      %v762 = vpow.pop %v761
      %v763 = vmul.f32 %v733, 1.442695
      %v764 = vpow.pop %v763
      %v765 = vmul.f32 %v734, 1.442695
      %v766 = vpow.pop %v765
      %v767 = vadd.f32 %v752, 1.0
      %v768 = vadd.f32 %v754, 1.0
      %v769 = vadd.f32 %v756, 1.0
      %v770 = vadd.f32 %v758, 1.0
      %v771 = vadd.f32 %v760, 1.0
      %v772 = vadd.f32 %v762, 1.0
      %v773 = vadd.f32 %v764, 1.0
      %v774 = vadd.f32 %v766, 1.0
      %v775 = vmul.f32 %v743, %v767
      %v776 = vmul.f32 %v744, %v768
      %v777 = vmul.f32 %v745, %v769
      %v778 = vmul.f32 %v746, %v770
      %v779 = vmul.f32 %v747, %v771
      %v780 = vmul.f32 %v748, %v772
      %v781 = vmul.f32 %v749, %v773
      %v782 = vmul.f32 %v750, %v774
      %vm783 = vcmp.gt.f32.partialorder %v719, 0.0
      %vm784 = vcmp.gt.f32.partialorder %v720, 0.0
      %vm785 = vcmp.gt.f32.partialorder %v721, 0.0
      %vm786 = vcmp.gt.f32.partialorder %v722, 0.0
      %vm787 = vcmp.gt.f32.partialorder %v723, 0.0
      %vm788 = vcmp.gt.f32.partialorder %v724, 0.0
      %vm789 = vcmp.gt.f32.partialorder %v725, 0.0
      %vm790 = vcmp.gt.f32.partialorder %v726, 0.0
      %v791 = vsel %vm783, %v719, %v775
      %v792 = vsel %vm784, %v720, %v776
      %v793 = vsel %vm785, %v721, %v777
      %v794 = vsel %vm786, %v722, %v778
      %v795 = vsel %vm787, %v723, %v779
      %v796 = vsel %vm788, %v724, %v780
      %v797 = vsel %vm789, %v725, %v781
      %v798 = vsel %vm790, %v726, %v782
      %v799 = vld [vmem:[%s5] sm:$0xff]
      %v800 = vld [vmem:[%s5 + $0x8] sm:$0xff]
      %v801 = vld [vmem:[%s5 + $0x10] sm:$0xff]
      %v802 = vld [vmem:[%s5 + $0x18] sm:$0xff]
      %v803 = vld [vmem:[%s5 + $0x20] sm:$0xff]
      %v804 = vld [vmem:[%s5 + $0x28] sm:$0xff]
      %v805 = vld [vmem:[%s5 + $0x30] sm:$0xff]
      %v806 = vld [vmem:[%s5 + $0x38] sm:$0xff]
      %v807 = vld [vmem:[%s5 + $0x40] sm:$0xff]
      %v808 = vld [vmem:[%s5 + $0x48] sm:$0xff]
      %v809 = vld [vmem:[%s5 + $0x50] sm:$0xff]
      %v810 = vld [vmem:[%s5 + $0x58] sm:$0xff]
      %v811 = vld [vmem:[%s5 + $0x60] sm:$0xff]
      %v812 = vld [vmem:[%s5 + $0x68] sm:$0xff]
      %v813 = vld [vmem:[%s5 + $0x70] sm:$0xff]
      %v814 = vld [vmem:[%s5 + $0x78] sm:$0xff]
      %v815 = vld [vmem:[%s6] sm:$0x1]
      %v817 = vlaneseq
      %v818 = vshrl.u32 %v817, 7
      %v819 = vsub.s32 0, %v818
      %v820 = vrot.slane %v815, %v819
      %822 = vmatprep.subr.mxu0 0.0
      %823 = vmatpush1.msra.mxu0 %v799
      %824 = vmatprep.subr.mxu0 0.0
      %825 = vmatpush1.msra.mxu0 %v800
      %826 = vmatprep.subr.mxu0 0.0
      %827 = vmatpush1.msra.mxu0 %v801
      %828 = vmatprep.subr.mxu0 0.0
      %829 = vmatpush1.msra.mxu0 %v802
      %830 = vmatprep.subr.mxu0 0.0
      %831 = vmatpush1.msra.mxu0 %v803
      %832 = vmatprep.subr.mxu0 0.0
      %833 = vmatpush1.msra.mxu0 %v804
      %834 = vmatprep.subr.mxu0 0.0
      %835 = vmatpush1.msra.mxu0 %v805
      %836 = vmatprep.subr.mxu0 0.0
      %837 = vmatpush1.msra.mxu0 %v806
      %838 = vmatprep.subr.mxu0 0.0
      %839 = vmatpush1.msra.mxu0 %v807
      %840 = vmatprep.subr.mxu0 0.0
      %841 = vmatpush1.msra.mxu0 %v808
      %842 = vmatprep.subr.mxu0 0.0
      %843 = vmatpush1.msra.mxu0 %v809
      %844 = vmatprep.subr.mxu0 0.0
      %845 = vmatpush1.msra.mxu0 %v810
      %846 = vmatprep.subr.mxu0 0.0
      %847 = vmatpush1.msra.mxu0 %v811
      %848 = vmatprep.subr.mxu0 0.0
      %849 = vmatpush1.msra.mxu0 %v812
      %850 = vmatprep.subr.mxu0 0.0
      %851 = vmatpush1.msra.mxu0 %v813
      %852 = vmatprep.subr.mxu0 0.0
      %853 = vmatpush1.msra.mxu0 %v814
      %854 = vmatprep.subr.mxu0 0.0
      %855 = vmatpush1.msra.mxu0 0.0
      %856 = vmatprep.subr.mxu0 0.0
      %857 = vmatpush1.msra.mxu0 0.0
      %858 = vmatprep.subr.mxu0 0.0
      %859 = vmatpush1.msra.mxu0 0.0
      %860 = vmatprep.subr.mxu0 0.0
      %861 = vmatpush1.msra.mxu0 0.0
      %862 = vmatprep.subr.mxu0 0.0
      %863 = vmatpush1.msra.mxu0 0.0
      %864 = vmatprep.subr.mxu0 0.0
      %865 = vmatpush1.msra.mxu0 0.0
      %866 = vmatprep.subr.mxu0 0.0
      %867 = vmatpush1.msra.mxu0 0.0
      %868 = vmatprep.subr.mxu0 0.0
      %869 = vmatpush1.msra.mxu0 0.0
      %870 = vmatprep.subr.mxu0 0.0
      %871 = vmatpush1.msra.mxu0 0.0
      %872 = vmatprep.subr.mxu0 0.0
      %873 = vmatpush1.msra.mxu0 0.0
      %874 = vmatprep.subr.mxu0 0.0
      %875 = vmatpush1.msra.mxu0 0.0
      %876 = vmatprep.subr.mxu0 0.0
      %877 = vmatpush1.msra.mxu0 0.0
      %878 = vmatprep.subr.mxu0 0.0
      %879 = vmatpush1.msra.mxu0 0.0
      %880 = vmatprep.subr.mxu0 0.0
      %881 = vmatpush1.msra.mxu0 0.0
      %882 = vmatprep.subr.mxu0 0.0
      %883 = vmatpush1.msra.mxu0 0.0
      %884 = vmatprep.subr.mxu0 0.0
      %885 = vmatpush1.msra.mxu0 0.0
      %886 = vmatprep.mubr.f32.mxu0 0.0
      %887 = vmatmul.mubr.f32.gmra.mrb[0].mxu0 %v791
      %v888 = vpop.f32.mrb[0].mxu0
      %v889 = vadd.f32 %v820, %v888
      %v890 = vpop.f32.mrb[0].mxu0
      %891 = vmatprep.mubr.f32.mxu0 0.0
      %892 = vmatmul.mubr.f32.gmra.mrb[0].mxu0 %v792
      %v893 = vpop.f32.mrb[0].mxu0
      %v894 = vadd.f32 %v820, %v893
      %v895 = vpop.f32.mrb[0].mxu0
      %896 = vmatprep.mubr.f32.mxu0 0.0
      %897 = vmatmul.mubr.f32.gmra.mrb[0].mxu0 %v793
      %v898 = vpop.f32.mrb[0].mxu0
      %v899 = vadd.f32 %v820, %v898
      %v900 = vpop.f32.mrb[0].mxu0
      %901 = vmatprep.mubr.f32.mxu0 0.0
      %902 = vmatmul.mubr.f32.gmra.mrb[0].mxu0 %v794
      %v903 = vpop.f32.mrb[0].mxu0
      %v904 = vadd.f32 %v820, %v903
      %v905 = vpop.f32.mrb[0].mxu0
      %906 = vmatprep.mubr.f32.mxu0 0.0
      %907 = vmatmul.mubr.f32.gmra.mrb[0].mxu0 %v795
      %v908 = vpop.f32.mrb[0].mxu0
      %v909 = vadd.f32 %v820, %v908
      %v910 = vpop.f32.mrb[0].mxu0
      %911 = vmatprep.mubr.f32.mxu0 0.0
      %912 = vmatmul.mubr.f32.gmra.mrb[0].mxu0 %v796
      %v913 = vpop.f32.mrb[0].mxu0
      %v914 = vadd.f32 %v820, %v913
      %v915 = vpop.f32.mrb[0].mxu0
      %916 = vmatprep.mubr.f32.mxu0 0.0
      %917 = vmatmul.mubr.f32.gmra.mrb[0].mxu0 %v797
      %v918 = vpop.f32.mrb[0].mxu0
      %v919 = vadd.f32 %v820, %v918
      %v920 = vpop.f32.mrb[0].mxu0
      %921 = vmatprep.mubr.f32.mxu0 0.0
      %922 = vmatmul.mubr.f32.gmra.mrb[0].mxu0 %v798
      %v923 = vpop.f32.mrb[0].mxu0
      %v924 = vadd.f32 %v820, %v923
      %v925 = vpop.f32.mrb[0].mxu0
      %926 = vdwg.mxu0
      %v927 = vmin.f32 %v889, 0.0
      %v928 = vmin.f32 %v894, 0.0
      %v929 = vmin.f32 %v899, 0.0
      %v930 = vmin.f32 %v904, 0.0
      %v931 = vmin.f32 %v909, 0.0
      %v932 = vmin.f32 %v914, 0.0
      %v933 = vmin.f32 %v919, 0.0
      %v934 = vmin.f32 %v924, 0.0
      %v935 = vmul.f32 %v927, 0.5
      %v936 = vmul.f32 %v928, 0.5
      %v937 = vmul.f32 %v929, 0.5
      %v938 = vmul.f32 %v930, 0.5
      %v939 = vmul.f32 %v931, 0.5
      %v940 = vmul.f32 %v932, 0.5
      %v941 = vmul.f32 %v933, 0.5
      %v942 = vmul.f32 %v934, 0.5
      %v943 = vtanh.pop %v935
      %v944 = vtanh.pop %v936
      %v945 = vtanh.pop %v937
      %v946 = vtanh.pop %v938
      %v947 = vtanh.pop %v939
      %v948 = vtanh.pop %v940
      %v949 = vtanh.pop %v941
      %v950 = vtanh.pop %v942
      %v951 = vmul.f32 %v927, 1.442695
      %v952 = vpow.pop %v951
      %v953 = vmul.f32 %v928, 1.442695
      %v954 = vpow.pop %v953
      %v955 = vmul.f32 %v929, 1.442695
      %v956 = vpow.pop %v955
      %v957 = vmul.f32 %v930, 1.442695
      %v958 = vpow.pop %v957
      %v959 = vmul.f32 %v931, 1.442695
      %v960 = vpow.pop %v959
      %v961 = vmul.f32 %v932, 1.442695
      %v962 = vpow.pop %v961
      %v963 = vmul.f32 %v933, 1.442695
      %v964 = vpow.pop %v963
      %v965 = vmul.f32 %v934, 1.442695
      %v966 = vpow.pop %v965
      %v967 = vadd.f32 %v952, 1.0
      %v968 = vadd.f32 %v954, 1.0
      %v969 = vadd.f32 %v956, 1.0
      %v970 = vadd.f32 %v958, 1.0
      %v971 = vadd.f32 %v960, 1.0
      %v972 = vadd.f32 %v962, 1.0
      %v973 = vadd.f32 %v964, 1.0
      %v974 = vadd.f32 %v966, 1.0
      %v975 = vmul.f32 %v943, %v967
      %v976 = vmul.f32 %v944, %v968
      %v977 = vmul.f32 %v945, %v969
      %v978 = vmul.f32 %v946, %v970
      %v979 = vmul.f32 %v947, %v971
      %v980 = vmul.f32 %v948, %v972
      %v981 = vmul.f32 %v949, %v973
      %v982 = vmul.f32 %v950, %v974
      %vm983 = vcmp.gt.f32.partialorder %v889, 0.0
      %vm984 = vcmp.gt.f32.partialorder %v894, 0.0
      %vm985 = vcmp.gt.f32.partialorder %v899, 0.0
      %vm986 = vcmp.gt.f32.partialorder %v904, 0.0
      %vm987 = vcmp.gt.f32.partialorder %v909, 0.0
      %vm988 = vcmp.gt.f32.partialorder %v914, 0.0
      %vm989 = vcmp.gt.f32.partialorder %v919, 0.0
      %vm990 = vcmp.gt.f32.partialorder %v924, 0.0
      %v991 = vsel %vm983, %v889, %v975
      %v992 = vsel %vm984, %v894, %v976
      %v993 = vsel %vm985, %v899, %v977
      %v994 = vsel %vm986, %v904, %v978
      %v995 = vsel %vm987, %v909, %v979
      %v996 = vsel %vm988, %v914, %v980
      %v997 = vsel %vm989, %v919, %v981
      %v998 = vsel %vm990, %v924, %v982
      %v999 = vld [vmem:[%s7] sm:$0xff]
      %v1000 = vld [vmem:[%s7 + $0x8] sm:$0xff]
      %v1001 = vld [vmem:[%s7 + $0x10] sm:$0xff]
      %v1002 = vld [vmem:[%s7 + $0x18] sm:$0xff]
      %v1003 = vld [vmem:[%s7 + $0x20] sm:$0xff]
      %v1004 = vld [vmem:[%s7 + $0x28] sm:$0xff]
      %v1005 = vld [vmem:[%s7 + $0x30] sm:$0xff]
      %v1006 = vld [vmem:[%s7 + $0x38] sm:$0xff]
      %v1007 = vld [vmem:[%s7 + $0x40] sm:$0xff]
      %v1008 = vld [vmem:[%s7 + $0x48] sm:$0xff]
      %v1009 = vld [vmem:[%s7 + $0x50] sm:$0xff]
      %v1010 = vld [vmem:[%s7 + $0x58] sm:$0xff]
      %v1011 = vld [vmem:[%s7 + $0x60] sm:$0xff]
      %v1012 = vld [vmem:[%s7 + $0x68] sm:$0xff]
      %v1013 = vld [vmem:[%s7 + $0x70] sm:$0xff]
      %v1014 = vld [vmem:[%s7 + $0x78] sm:$0xff]
      %v1015 = vld [vmem:[%s8] sm:$0x1]
      %v1017 = vlaneseq
      %v1018 = vshrl.u32 %v1017, 7
      %v1019 = vsub.s32 0, %v1018
      %v1020 = vrot.slane %v1015, %v1019
      %1022 = vmatprep.subr.mxu0 0.0
      %1023 = vmatpush1.msra.mxu0 %v999
      %1024 = vmatprep.subr.mxu0 0.0
      %1025 = vmatpush1.msra.mxu0 %v1000
      %1026 = vmatprep.subr.mxu0 0.0
      %1027 = vmatpush1.msra.mxu0 %v1001
      %1028 = vmatprep.subr.mxu0 0.0
      %1029 = vmatpush1.msra.mxu0 %v1002
      %1030 = vmatprep.subr.mxu0 0.0
      %1031 = vmatpush1.msra.mxu0 %v1003
      %1032 = vmatprep.subr.mxu0 0.0
      %1033 = vmatpush1.msra.mxu0 %v1004
      %1034 = vmatprep.subr.mxu0 0.0
      %1035 = vmatpush1.msra.mxu0 %v1005
      %1036 = vmatprep.subr.mxu0 0.0
      %1037 = vmatpush1.msra.mxu0 %v1006
      %1038 = vmatprep.subr.mxu0 0.0
      %1039 = vmatpush1.msra.mxu0 %v1007
      %1040 = vmatprep.subr.mxu0 0.0
      %1041 = vmatpush1.msra.mxu0 %v1008
      %1042 = vmatprep.subr.mxu0 0.0
      %1043 = vmatpush1.msra.mxu0 %v1009
      %1044 = vmatprep.subr.mxu0 0.0
      %1045 = vmatpush1.msra.mxu0 %v1010
      %1046 = vmatprep.subr.mxu0 0.0
      %1047 = vmatpush1.msra.mxu0 %v1011
      %1048 = vmatprep.subr.mxu0 0.0
      %1049 = vmatpush1.msra.mxu0 %v1012
      %1050 = vmatprep.subr.mxu0 0.0
      %1051 = vmatpush1.msra.mxu0 %v1013
      %1052 = vmatprep.subr.mxu0 0.0
      %1053 = vmatpush1.msra.mxu0 %v1014
      %1054 = vmatprep.subr.mxu0 0.0
      %1055 = vmatpush1.msra.mxu0 0.0
      %1056 = vmatprep.subr.mxu0 0.0
      %1057 = vmatpush1.msra.mxu0 0.0
      %1058 = vmatprep.subr.mxu0 0.0
      %1059 = vmatpush1.msra.mxu0 0.0
      %1060 = vmatprep.subr.mxu0 0.0
      %1061 = vmatpush1.msra.mxu0 0.0
      %1062 = vmatprep.subr.mxu0 0.0
      %1063 = vmatpush1.msra.mxu0 0.0
      %1064 = vmatprep.subr.mxu0 0.0
      %1065 = vmatpush1.msra.mxu0 0.0
      %1066 = vmatprep.subr.mxu0 0.0
      %1067 = vmatpush1.msra.mxu0 0.0
      %1068 = vmatprep.subr.mxu0 0.0
      %1069 = vmatpush1.msra.mxu0 0.0
      %1070 = vmatprep.subr.mxu0 0.0
      %1071 = vmatpush1.msra.mxu0 0.0
      %1072 = vmatprep.subr.mxu0 0.0
      %1073 = vmatpush1.msra.mxu0 0.0
      %1074 = vmatprep.subr.mxu0 0.0
      %1075 = vmatpush1.msra.mxu0 0.0
      %1076 = vmatprep.subr.mxu0 0.0
      %1077 = vmatpush1.msra.mxu0 0.0
      %1078 = vmatprep.subr.mxu0 0.0
      %1079 = vmatpush1.msra.mxu0 0.0
      %1080 = vmatprep.subr.mxu0 0.0
      %1081 = vmatpush1.msra.mxu0 0.0
      %1082 = vmatprep.subr.mxu0 0.0
      %1083 = vmatpush1.msra.mxu0 0.0
      %1084 = vmatprep.subr.mxu0 0.0
      %1085 = vmatpush1.msra.mxu0 0.0
      %1086 = vmatprep.mubr.f32.mxu0 0.0
      %1087 = vmatmul.mubr.f32.gmra.mrb[0].mxu0 %v991
      %v1088 = vpop.f32.mrb[0].mxu0
      %v1089 = vadd.f32 %v1020, %v1088
      %v1090 = vpop.f32.mrb[0].mxu0
      %1091 = vmatprep.mubr.f32.mxu0 0.0
      %1092 = vmatmul.mubr.f32.gmra.mrb[0].mxu0 %v992
      %v1093 = vpop.f32.mrb[0].mxu0
      %v1094 = vadd.f32 %v1020, %v1093
      %v1095 = vpop.f32.mrb[0].mxu0
      %1096 = vmatprep.mubr.f32.mxu0 0.0
      %1097 = vmatmul.mubr.f32.gmra.mrb[0].mxu0 %v993
      %v1098 = vpop.f32.mrb[0].mxu0
      %v1099 = vadd.f32 %v1020, %v1098
      %v1100 = vpop.f32.mrb[0].mxu0
      %1101 = vmatprep.mubr.f32.mxu0 0.0
      %1102 = vmatmul.mubr.f32.gmra.mrb[0].mxu0 %v994
      %v1103 = vpop.f32.mrb[0].mxu0
      %v1104 = vadd.f32 %v1020, %v1103
      %v1105 = vpop.f32.mrb[0].mxu0
      %1106 = vmatprep.mubr.f32.mxu0 0.0
      %1107 = vmatmul.mubr.f32.gmra.mrb[0].mxu0 %v995
      %v1108 = vpop.f32.mrb[0].mxu0
      %v1109 = vadd.f32 %v1020, %v1108
      %v1110 = vpop.f32.mrb[0].mxu0
      %1111 = vmatprep.mubr.f32.mxu0 0.0
      %1112 = vmatmul.mubr.f32.gmra.mrb[0].mxu0 %v996
      %v1113 = vpop.f32.mrb[0].mxu0
      %v1114 = vadd.f32 %v1020, %v1113
      %v1115 = vpop.f32.mrb[0].mxu0
      %1116 = vmatprep.mubr.f32.mxu0 0.0
      %1117 = vmatmul.mubr.f32.gmra.mrb[0].mxu0 %v997
      %v1118 = vpop.f32.mrb[0].mxu0
      %v1119 = vadd.f32 %v1020, %v1118
      %v1120 = vpop.f32.mrb[0].mxu0
      %1121 = vmatprep.mubr.f32.mxu0 0.0
      %1122 = vmatmul.mubr.f32.gmra.mrb[0].mxu0 %v998
      %v1123 = vpop.f32.mrb[0].mxu0
      %v1124 = vadd.f32 %v1020, %v1123
      %v1125 = vpop.f32.mrb[0].mxu0
      %1126 = vdwg.mxu0
      %v1127 = vmin.f32 %v1089, 0.0
      %v1128 = vmin.f32 %v1094, 0.0
      %v1129 = vmin.f32 %v1099, 0.0
      %v1130 = vmin.f32 %v1104, 0.0
      %v1131 = vmin.f32 %v1109, 0.0
      %v1132 = vmin.f32 %v1114, 0.0
      %v1133 = vmin.f32 %v1119, 0.0
      %v1134 = vmin.f32 %v1124, 0.0
      %v1135 = vmul.f32 %v1127, 0.5
      %v1136 = vmul.f32 %v1128, 0.5
      %v1137 = vmul.f32 %v1129, 0.5
      %v1138 = vmul.f32 %v1130, 0.5
      %v1139 = vmul.f32 %v1131, 0.5
      %v1140 = vmul.f32 %v1132, 0.5
      %v1141 = vmul.f32 %v1133, 0.5
      %v1142 = vmul.f32 %v1134, 0.5
      %v1143 = vtanh.pop %v1135
      %v1144 = vtanh.pop %v1136
      %v1145 = vtanh.pop %v1137
      %v1146 = vtanh.pop %v1138
      %v1147 = vtanh.pop %v1139
      %v1148 = vtanh.pop %v1140
      %v1149 = vtanh.pop %v1141
      %v1150 = vtanh.pop %v1142
      %v1151 = vmul.f32 %v1127, 1.442695
      %v1152 = vpow.pop %v1151
      %v1153 = vmul.f32 %v1128, 1.442695
      %v1154 = vpow.pop %v1153
      %v1155 = vmul.f32 %v1129, 1.442695
      %v1156 = vpow.pop %v1155
      %v1157 = vmul.f32 %v1130, 1.442695
      %v1158 = vpow.pop %v1157
      %v1159 = vmul.f32 %v1131, 1.442695
      %v1160 = vpow.pop %v1159
      %v1161 = vmul.f32 %v1132, 1.442695
      %v1162 = vpow.pop %v1161
      %v1163 = vmul.f32 %v1133, 1.442695
      %v1164 = vpow.pop %v1163
      %v1165 = vmul.f32 %v1134, 1.442695
      %v1166 = vpow.pop %v1165
      %v1167 = vadd.f32 %v1152, 1.0
      %v1168 = vadd.f32 %v1154, 1.0
      %v1169 = vadd.f32 %v1156, 1.0
      %v1170 = vadd.f32 %v1158, 1.0
      %v1171 = vadd.f32 %v1160, 1.0
      %v1172 = vadd.f32 %v1162, 1.0
      %v1173 = vadd.f32 %v1164, 1.0
      %v1174 = vadd.f32 %v1166, 1.0
      %v1175 = vmul.f32 %v1143, %v1167
      %v1176 = vmul.f32 %v1144, %v1168
      %v1177 = vmul.f32 %v1145, %v1169
      %v1178 = vmul.f32 %v1146, %v1170
      %v1179 = vmul.f32 %v1147, %v1171
      %v1180 = vmul.f32 %v1148, %v1172
      %v1181 = vmul.f32 %v1149, %v1173
      %v1182 = vmul.f32 %v1150, %v1174
      %vm1183 = vcmp.gt.f32.partialorder %v1089, 0.0
      %vm1184 = vcmp.gt.f32.partialorder %v1094, 0.0
      %vm1185 = vcmp.gt.f32.partialorder %v1099, 0.0
      %vm1186 = vcmp.gt.f32.partialorder %v1104, 0.0
      %vm1187 = vcmp.gt.f32.partialorder %v1109, 0.0
      %vm1188 = vcmp.gt.f32.partialorder %v1114, 0.0
      %vm1189 = vcmp.gt.f32.partialorder %v1119, 0.0
      %vm1190 = vcmp.gt.f32.partialorder %v1124, 0.0
      %v1191 = vsel %vm1183, %v1089, %v1175
      %v1192 = vsel %vm1184, %v1094, %v1176
      %v1193 = vsel %vm1185, %v1099, %v1177
      %v1194 = vsel %vm1186, %v1104, %v1178
      %v1195 = vsel %vm1187, %v1109, %v1179
      %v1196 = vsel %vm1188, %v1114, %v1180
      %v1197 = vsel %vm1189, %v1119, %v1181
      %v1198 = vsel %vm1190, %v1124, %v1182
      %v1199 = vld [vmem:[%s9] sm:$0xff]
      %v1200 = vld [vmem:[%s9 + $0x8] sm:$0xff]
      %v1201 = vld [vmem:[%s9 + $0x10] sm:$0xff]
      %v1202 = vld [vmem:[%s9 + $0x18] sm:$0xff]
      %v1203 = vld [vmem:[%s9 + $0x20] sm:$0xff]
      %v1204 = vld [vmem:[%s9 + $0x28] sm:$0xff]
      %v1205 = vld [vmem:[%s9 + $0x30] sm:$0xff]
      %v1206 = vld [vmem:[%s9 + $0x38] sm:$0xff]
      %v1207 = vld [vmem:[%s9 + $0x40] sm:$0xff]
      %v1208 = vld [vmem:[%s9 + $0x48] sm:$0xff]
      %v1209 = vld [vmem:[%s9 + $0x50] sm:$0xff]
      %v1210 = vld [vmem:[%s9 + $0x58] sm:$0xff]
      %v1211 = vld [vmem:[%s9 + $0x60] sm:$0xff]
      %v1212 = vld [vmem:[%s9 + $0x68] sm:$0xff]
      %v1213 = vld [vmem:[%s9 + $0x70] sm:$0xff]
      %v1214 = vld [vmem:[%s9 + $0x78] sm:$0xff]
      %v1215 = vld [vmem:[%s10] sm:$0x1]
      %v1217 = vlaneseq
      %v1218 = vshrl.u32 %v1217, 7
      %v1219 = vsub.s32 0, %v1218
      %v1220 = vrot.slane %v1215, %v1219
      %1222 = vmatprep.subr.mxu0 0.0
      %1223 = vmatpush1.msra.mxu0 %v1199
      %1224 = vmatprep.subr.mxu0 0.0
      %1225 = vmatpush1.msra.mxu0 %v1200
      %1226 = vmatprep.subr.mxu0 0.0
      %1227 = vmatpush1.msra.mxu0 %v1201
      %1228 = vmatprep.subr.mxu0 0.0
      %1229 = vmatpush1.msra.mxu0 %v1202
      %1230 = vmatprep.subr.mxu0 0.0
      %1231 = vmatpush1.msra.mxu0 %v1203
      %1232 = vmatprep.subr.mxu0 0.0
      %1233 = vmatpush1.msra.mxu0 %v1204
      %1234 = vmatprep.subr.mxu0 0.0
      %1235 = vmatpush1.msra.mxu0 %v1205
      %1236 = vmatprep.subr.mxu0 0.0
      %1237 = vmatpush1.msra.mxu0 %v1206
      %1238 = vmatprep.subr.mxu0 0.0
      %1239 = vmatpush1.msra.mxu0 %v1207
      %1240 = vmatprep.subr.mxu0 0.0
      %1241 = vmatpush1.msra.mxu0 %v1208
      %1242 = vmatprep.subr.mxu0 0.0
      %1243 = vmatpush1.msra.mxu0 %v1209
      %1244 = vmatprep.subr.mxu0 0.0
      %1245 = vmatpush1.msra.mxu0 %v1210
      %1246 = vmatprep.subr.mxu0 0.0
      %1247 = vmatpush1.msra.mxu0 %v1211
      %1248 = vmatprep.subr.mxu0 0.0
      %1249 = vmatpush1.msra.mxu0 %v1212
      %1250 = vmatprep.subr.mxu0 0.0
      %1251 = vmatpush1.msra.mxu0 %v1213
      %1252 = vmatprep.subr.mxu0 0.0
      %1253 = vmatpush1.msra.mxu0 %v1214
      %1254 = vmatprep.subr.mxu0 0.0
      %1255 = vmatpush1.msra.mxu0 0.0
      %1256 = vmatprep.subr.mxu0 0.0
      %1257 = vmatpush1.msra.mxu0 0.0
      %1258 = vmatprep.subr.mxu0 0.0
      %1259 = vmatpush1.msra.mxu0 0.0
      %1260 = vmatprep.subr.mxu0 0.0
      %1261 = vmatpush1.msra.mxu0 0.0
      %1262 = vmatprep.subr.mxu0 0.0
      %1263 = vmatpush1.msra.mxu0 0.0
      %1264 = vmatprep.subr.mxu0 0.0
      %1265 = vmatpush1.msra.mxu0 0.0
      %1266 = vmatprep.subr.mxu0 0.0
      %1267 = vmatpush1.msra.mxu0 0.0
      %1268 = vmatprep.subr.mxu0 0.0
      %1269 = vmatpush1.msra.mxu0 0.0
      %1270 = vmatprep.subr.mxu0 0.0
      %1271 = vmatpush1.msra.mxu0 0.0
      %1272 = vmatprep.subr.mxu0 0.0
      %1273 = vmatpush1.msra.mxu0 0.0
      %1274 = vmatprep.subr.mxu0 0.0
      %1275 = vmatpush1.msra.mxu0 0.0
      %1276 = vmatprep.subr.mxu0 0.0
      %1277 = vmatpush1.msra.mxu0 0.0
      %1278 = vmatprep.subr.mxu0 0.0
      %1279 = vmatpush1.msra.mxu0 0.0
      %1280 = vmatprep.subr.mxu0 0.0
      %1281 = vmatpush1.msra.mxu0 0.0
      %1282 = vmatprep.subr.mxu0 0.0
      %1283 = vmatpush1.msra.mxu0 0.0
      %1284 = vmatprep.subr.mxu0 0.0
      %1285 = vmatpush1.msra.mxu0 0.0
      %1286 = vmatprep.mubr.f32.mxu0 0.0
      %1287 = vmatmul.mubr.f32.gmra.mrb[0].mxu0 %v1191
      %v1288 = vpop.f32.mrb[0].mxu0
      %v1289 = vadd.f32 %v1220, %v1288
      %v1290 = vpop.f32.mrb[0].mxu0
      %1291 = vmatprep.mubr.f32.mxu0 0.0
      %1292 = vmatmul.mubr.f32.gmra.mrb[0].mxu0 %v1192
      %v1293 = vpop.f32.mrb[0].mxu0
      %v1294 = vadd.f32 %v1220, %v1293
      %v1295 = vpop.f32.mrb[0].mxu0
      %1296 = vmatprep.mubr.f32.mxu0 0.0
      %1297 = vmatmul.mubr.f32.gmra.mrb[0].mxu0 %v1193
      %v1298 = vpop.f32.mrb[0].mxu0
      %v1299 = vadd.f32 %v1220, %v1298
      %v1300 = vpop.f32.mrb[0].mxu0
      %1301 = vmatprep.mubr.f32.mxu0 0.0
      %1302 = vmatmul.mubr.f32.gmra.mrb[0].mxu0 %v1194
      %v1303 = vpop.f32.mrb[0].mxu0
      %v1304 = vadd.f32 %v1220, %v1303
      %v1305 = vpop.f32.mrb[0].mxu0
      %1306 = vmatprep.mubr.f32.mxu0 0.0
      %1307 = vmatmul.mubr.f32.gmra.mrb[0].mxu0 %v1195
      %v1308 = vpop.f32.mrb[0].mxu0
      %v1309 = vadd.f32 %v1220, %v1308
      %v1310 = vpop.f32.mrb[0].mxu0
      %1311 = vmatprep.mubr.f32.mxu0 0.0
      %1312 = vmatmul.mubr.f32.gmra.mrb[0].mxu0 %v1196
      %v1313 = vpop.f32.mrb[0].mxu0
      %v1314 = vadd.f32 %v1220, %v1313
      %v1315 = vpop.f32.mrb[0].mxu0
      %1316 = vmatprep.mubr.f32.mxu0 0.0
      %1317 = vmatmul.mubr.f32.gmra.mrb[0].mxu0 %v1197
      %v1318 = vpop.f32.mrb[0].mxu0
      %v1319 = vadd.f32 %v1220, %v1318
      %v1320 = vpop.f32.mrb[0].mxu0
      %1321 = vmatprep.mubr.f32.mxu0 0.0
      %1322 = vmatmul.mubr.f32.gmra.mrb[0].mxu0 %v1198
      %v1323 = vpop.f32.mrb[0].mxu0
      %v1324 = vadd.f32 %v1220, %v1323
      %v1325 = vpop.f32.mrb[0].mxu0
      %1326 = vdwg.mxu0
      %v1327 = vmin.f32 %v1289, 0.0
      %v1328 = vmin.f32 %v1294, 0.0
      %v1329 = vmin.f32 %v1299, 0.0
      %v1330 = vmin.f32 %v1304, 0.0
      %v1331 = vmin.f32 %v1309, 0.0
      %v1332 = vmin.f32 %v1314, 0.0
      %v1333 = vmin.f32 %v1319, 0.0
      %v1334 = vmin.f32 %v1324, 0.0
      %v1335 = vmul.f32 %v1327, 0.5
      %v1336 = vmul.f32 %v1328, 0.5
      %v1337 = vmul.f32 %v1329, 0.5
      %v1338 = vmul.f32 %v1330, 0.5
      %v1339 = vmul.f32 %v1331, 0.5
      %v1340 = vmul.f32 %v1332, 0.5
      %v1341 = vmul.f32 %v1333, 0.5
      %v1342 = vmul.f32 %v1334, 0.5
      %v1343 = vtanh.pop %v1335
      %v1344 = vtanh.pop %v1336
      %v1345 = vtanh.pop %v1337
      %v1346 = vtanh.pop %v1338
      %v1347 = vtanh.pop %v1339
      %v1348 = vtanh.pop %v1340
      %v1349 = vtanh.pop %v1341
      %v1350 = vtanh.pop %v1342
      %v1351 = vmul.f32 %v1327, 1.442695
      %v1352 = vpow.pop %v1351
      %v1353 = vmul.f32 %v1328, 1.442695
      %v1354 = vpow.pop %v1353
      %v1355 = vmul.f32 %v1329, 1.442695
      %v1356 = vpow.pop %v1355
      %v1357 = vmul.f32 %v1330, 1.442695
      %v1358 = vpow.pop %v1357
      %v1359 = vmul.f32 %v1331, 1.442695
      %v1360 = vpow.pop %v1359
      %v1361 = vmul.f32 %v1332, 1.442695
      %v1362 = vpow.pop %v1361
      %v1363 = vmul.f32 %v1333, 1.442695
      %v1364 = vpow.pop %v1363
      %v1365 = vmul.f32 %v1334, 1.442695
      %v1366 = vpow.pop %v1365
      %v1367 = vadd.f32 %v1352, 1.0
      %v1368 = vadd.f32 %v1354, 1.0
      %v1369 = vadd.f32 %v1356, 1.0
      %v1370 = vadd.f32 %v1358, 1.0
      %v1371 = vadd.f32 %v1360, 1.0
      %v1372 = vadd.f32 %v1362, 1.0
      %v1373 = vadd.f32 %v1364, 1.0
      %v1374 = vadd.f32 %v1366, 1.0
      %v1375 = vmul.f32 %v1343, %v1367
      %v1376 = vmul.f32 %v1344, %v1368
      %v1377 = vmul.f32 %v1345, %v1369
      %v1378 = vmul.f32 %v1346, %v1370
      %v1379 = vmul.f32 %v1347, %v1371
      %v1380 = vmul.f32 %v1348, %v1372
      %v1381 = vmul.f32 %v1349, %v1373
      %v1382 = vmul.f32 %v1350, %v1374
      %vm1383 = vcmp.gt.f32.partialorder %v1289, 0.0
      %vm1384 = vcmp.gt.f32.partialorder %v1294, 0.0
      %vm1385 = vcmp.gt.f32.partialorder %v1299, 0.0
      %vm1386 = vcmp.gt.f32.partialorder %v1304, 0.0
      %vm1387 = vcmp.gt.f32.partialorder %v1309, 0.0
      %vm1388 = vcmp.gt.f32.partialorder %v1314, 0.0
      %vm1389 = vcmp.gt.f32.partialorder %v1319, 0.0
      %vm1390 = vcmp.gt.f32.partialorder %v1324, 0.0
      %v1391 = vsel %vm1383, %v1289, %v1375
      %v1392 = vsel %vm1384, %v1294, %v1376
      %v1393 = vsel %vm1385, %v1299, %v1377
      %v1394 = vsel %vm1386, %v1304, %v1378
      %v1395 = vsel %vm1387, %v1309, %v1379
      %v1396 = vsel %vm1388, %v1314, %v1380
      %v1397 = vsel %vm1389, %v1319, %v1381
      %v1398 = vsel %vm1390, %v1324, %v1382
      %v1399 = vld [vmem:[%s11] sm:$0xf]
      %v1400 = vld [vmem:[%s12] sm:$0xf]
      %1402 = vset.pattern.permute.xlu0 0
      %1403 = vperm.xlu0 %1402, %v1400
      %v1404 = vpop.permute.xlu0 %1403
      %1406 = vmatprep.subr.mxu0 0.0
      %1407 = vmatpush1.xpose.msra.mxu0 %v1391
      %1408 = vmatprep.subr.mxu0 0.0
      %1409 = vmatpush1.xpose.msra.mxu0 %v1392
      %1410 = vmatprep.subr.mxu0 0.0
      %1411 = vmatpush1.xpose.msra.mxu0 %v1393
      %1412 = vmatprep.subr.mxu0 0.0
      %1413 = vmatpush1.xpose.msra.mxu0 %v1394
      %1414 = vmatprep.subr.mxu0 0.0
      %1415 = vmatpush1.xpose.msra.mxu0 %v1395
      %1416 = vmatprep.subr.mxu0 0.0
      %1417 = vmatpush1.xpose.msra.mxu0 %v1396
      %1418 = vmatprep.subr.mxu0 0.0
      %1419 = vmatpush1.xpose.msra.mxu0 %v1397
      %1420 = vmatprep.subr.mxu0 0.0
      %1421 = vmatpush1.xpose.msra.mxu0 %v1398
      %1422 = vmatprep.subr.mxu0 0.0
      %1423 = vmatpush1.xpose.msra.mxu0 0.0
      %1424 = vmatprep.subr.mxu0 0.0
      %1425 = vmatpush1.xpose.msra.mxu0 0.0
      %1426 = vmatprep.subr.mxu0 0.0
      %1427 = vmatpush1.xpose.msra.mxu0 0.0
      %1428 = vmatprep.subr.mxu0 0.0
      %1429 = vmatpush1.xpose.msra.mxu0 0.0
      %1430 = vmatprep.subr.mxu0 0.0
      %1431 = vmatpush1.xpose.msra.mxu0 0.0
      %1432 = vmatprep.subr.mxu0 0.0
      %1433 = vmatpush1.xpose.msra.mxu0 0.0
      %1434 = vmatprep.subr.mxu0 0.0
      %1435 = vmatpush1.xpose.msra.mxu0 0.0
      %1436 = vmatprep.subr.mxu0 0.0
      %1437 = vmatpush1.xpose.msra.mxu0 0.0
      %1438 = vmatprep.subr.mxu0 0.0
      %1439 = vmatpush1.xpose.msra.mxu0 0.0
      %1440 = vmatprep.subr.mxu0 0.0
      %1441 = vmatpush1.xpose.msra.mxu0 0.0
      %1442 = vmatprep.subr.mxu0 0.0
      %1443 = vmatpush1.xpose.msra.mxu0 0.0
      %1444 = vmatprep.subr.mxu0 0.0
      %1445 = vmatpush1.xpose.msra.mxu0 0.0
      %1446 = vmatprep.subr.mxu0 0.0
      %1447 = vmatpush1.xpose.msra.mxu0 0.0
      %1448 = vmatprep.subr.mxu0 0.0
      %1449 = vmatpush1.xpose.msra.mxu0 0.0
      %1450 = vmatprep.subr.mxu0 0.0
      %1451 = vmatpush1.xpose.msra.mxu0 0.0
      %1452 = vmatprep.subr.mxu0 0.0
      %1453 = vmatpush1.xpose.msra.mxu0 0.0
      %1454 = vmatprep.subr.mxu0 0.0
      %1455 = vmatpush1.xpose.msra.mxu0 0.0
      %1456 = vmatprep.subr.mxu0 0.0
      %1457 = vmatpush1.xpose.msra.mxu0 0.0
      %1458 = vmatprep.subr.mxu0 0.0
      %1459 = vmatpush1.xpose.msra.mxu0 0.0
      %1460 = vmatprep.subr.mxu0 0.0
      %1461 = vmatpush1.xpose.msra.mxu0 0.0
      %1462 = vmatprep.subr.mxu0 0.0
      %1463 = vmatpush1.xpose.msra.mxu0 0.0
      %1464 = vmatprep.subr.mxu0 0.0
      %1465 = vmatpush1.xpose.msra.mxu0 0.0
      %1466 = vmatprep.subr.mxu0 0.0
      %1467 = vmatpush1.xpose.msra.mxu0 0.0
      %1468 = vmatprep.subr.mxu0 0.0
      %1469 = vmatpush1.xpose.msra.mxu0 0.0
      %1470 = vmatprep.mubr.f32.mxu0 0.0
      %1471 = vmatmul.mubr.f32.gmra.mrb[0].mxu0 %v1399
      %v1472 = vpop.f32.mrb[0].mxu0
      %v1473 = vadd.f32 %v1404, %v1472
      %v1474 = vpop.f32.mrb[0].mxu0
      %1475 = vdwg.mxu0
      %vm1476 = vcmask 519168
      %1477 = vst.msk [vmem:[%s488] sm:$0xf] %vm1476, %v1473
      %p1478 = scmp.lt.s32.totalorder %s28, 1
      %s1479 = scalar_select %p1478, %s28, 1
      %p1480 = scmp.lt.s32.totalorder %s29, 0
      %s1481 = scalar_select %p1480, %s29, 0
      %s1482 = sadd.s32 %s1481, %s1479
      %s1483 = smul.addr %s1482, 4
      %s1484 = scalar_lea.vmem %s13, %s1483
      // Predicated region
      $region73: #{crom_forward.1} parent=71 // pred_check
        %p1485 = pneg %p341
      $region74: #{crom_forward.1} parent=71 // pred_check_branch
        %1487 = sbr.rel (%p1485) target = $region76
      $region75: #{crom_forward.1} parent=71 // pred_region
        _
      $region76: #{crom_forward.1} parent=71 // pred_fallthru
        _
    $region72: #{crom_forward.1} parent=5 // pred_fallthru
      _
    %p1488 = scmp.le.s32.totalorder 2, %s19
    // Predicated region
    $region77: #{crom_forward.1} parent=5 // pred_check
      %p1489 = pneg %p1488
    $region78: #{crom_forward.1} parent=5 // pred_check_branch
      %1491 = sbr.rel (%p1489) target = $region80
    $region79: #{crom_forward.1} parent=5 // pred_region
      %s1492 = ssub.s32 %s19, 2
      // Predicated region
      $region81: #{crom_forward.1} parent=79 // pred_check
        %p1493 = pneg %p347
      $region82: #{crom_forward.1} parent=79 // pred_check_branch
        %1495 = sbr.rel (%p1493) target = $region84
      $region83: #{crom_forward.1} parent=79 // pred_region
        %p1496 = scmp.lt.s32.totalorder %s30, 1
        %s1497 = scalar_select %p1496, %s30, 1
        %p1498 = scmp.lt.s32.totalorder %s31, 0
        %s1499 = scalar_select %p1498, %s31, 0
        %s1500 = sadd.s32 %s1499, %s1497
        %s1501 = smul.addr %s1500, 4
        %s1502 = scalar_lea.vmem %s13, %s1501
      $region84: #{crom_forward.1} parent=79 // pred_fallthru
        _
    $region80: #{crom_forward.1} parent=5 // pred_fallthru
      _
  $region6: #{crom_forward.1} parent=0 // loop_footer
    %s23 = sadd.s32 1, %s19
  $region7: #{crom_forward.1} parent=0 // loop_footer_branch
    %18 = sbr.rel target = $region3
  $region8: #{crom_forward.1} parent=0 // loop_exit
    _

</llo_original>
